<compile_context>
chip_gen: v6e
topology: v6e:2x2x1
jax: 0.10.0
libtpu: 0.0.40
codegen_flags: <defaults>
</compile_context>

<pallas_src>
import functools
import math

import jax
import jax.numpy as jnp
from jax.experimental import pallas as pl
from jax.experimental.pallas import tpu as pltpu


_VMEM_LIMIT = 48 * 1024 * 1024   # static: safe on v5e/v6e (128 MiB) and v7x (64 MiB)


def _pad_ch(c):
    """Pad a channel count to a lane-dense width (>=128, multiple of 8)."""
    return max(128, ((int(c) + 7) // 8) * 8)


# -----------------------------------------------------------------------------
# 3x3 "same" convolution: 9 accumulating per-tap matmuls over a flattened,
# padded activation slab.  No im2col scratch; weights stay resident across the
# inner (batch) grid axis.
# -----------------------------------------------------------------------------
def _conv_kernel(x_ref, w_ref, b_ref, o_ref, *, offsets, relu):
    # x_ref: (1, Lp, Cin_p) bf16 ; w_ref: (9*Cin_p, CoT) bf16
    # b_ref: (1, CoT) f32        ; o_ref: (1, M, CoT)  bf16
    m = o_ref.shape[1]
    cin = x_ref.shape[2]
    acc = None
    for t, off in enumerate(offsets):                       # static, unrolled
        d = jnp.dot(x_ref[0, off:off + m, :],
                    w_ref[t * cin:(t + 1) * cin, :],
                    preferred_element_type=jnp.float32)
        acc = d if acc is None else acc + d
    acc = acc + b_ref[...]
    if relu:
        acc = jnp.maximum(acc, 0.0)
    o_ref[0] = acc.astype(o_ref.dtype)


def _run_conv(x_flat, slab, bias, *, offsets, m, relu):
    n, lp, cin_p = x_flat.shape
    k, cout_p = slab.shape
    co_t = min(cout_p, 256)
    n_co = cout_p // co_t
    kern = functools.partial(_conv_kernel, offsets=tuple(offsets), relu=relu)
    return pl.pallas_call(
        kern,
        out_shape=jax.ShapeDtypeStruct((n, m, cout_p), jnp.bfloat16),
        grid_spec=pltpu.PrefetchScalarGridSpec(
            num_scalar_prefetch=0,
            # Cout outer (weights resident across the batch), batch inner.
            grid=(n_co, n),
            in_specs=[
                pl.BlockSpec((1, lp, cin_p), lambda j, b: (b, 0, 0)),
                pl.BlockSpec((k, co_t), lambda j, b: (0, j)),
                pl.BlockSpec((1, co_t), lambda j, b: (0, j)),
            ],
            out_specs=pl.BlockSpec((1, m, co_t), lambda j, b: (b, 0, j)),
        ),
        compiler_params=pltpu.CompilerParams(
            dimension_semantics=("parallel", "parallel"),
            vmem_limit_bytes=_VMEM_LIMIT),
    )(x_flat, slab, bias)


def _conv3x3_packed(x, slab, bias, *, relu):
    """x: (N,H,W,Cx) with Cx <= Cin_p; slab: (9*Cin_p, Cout_p) -> (N,H,W,Cout_p) bf16."""
    n, h, wd, cx = x.shape
    cin_p = slab.shape[0] // 9
    cout_p = slab.shape[1]
    wp, hp = wd + 2, h + 2
    # Single pad per layer: 1 top / 1 left / 1 right halo, 4 bottom rows
    # (1 halo + 3 per-image slack rows: (h+5)*wp >= hp*wp + 2*wp + 2 for wp>=2),
    # channel pad to Cin_p.  Junk rows (halo/slack positions) are cropped below.
    xp = jnp.pad(x.astype(jnp.bfloat16),
                 ((0, 0), (1, 4), (1, 1), (0, cin_p - cx)))
    x_flat = xp.reshape(n, (h + 5) * wp, cin_p)
    offsets = tuple(kh * wp + kw for kh in range(3) for kw in range(3))
    out = _run_conv(x_flat, slab, bias, offsets=offsets, m=hp * wp, relu=relu)
    # TODO(synk): keep this flat layout (junk rows zeroed in the kernel epilogue,
    # output shifted by wp+1) between the two convs of a block to drop one
    # pad/crop HBM round trip per block.
    return out.reshape(n, hp, wp, cout_p)[:, :h, :wd, :]


# -----------------------------------------------------------------------------
# ConvTranspose2d(k=3, stride=2, padding=1, output_padding=1) as a subpixel
# (4-parity-plane) conv.  Only the live taps of each plane are multiplied:
#   plane (pi,pj): y[2i+pi, 2j+pj] = sum_{live (dh,dw)} x[i+dh, j+dw] @ W[:,:,kh,kw]
# with (kh,kw) given by _DECONV_KHKW -- 9 live (plane, tap) pairs in total.
# -----------------------------------------------------------------------------
_DECONV_KHKW = (((1, 1),),                                   # plane (0,0)
                ((1, 2), (1, 0)),                            # plane (0,1)
                ((2, 1), (0, 1)),                            # plane (1,0)
                ((2, 2), (2, 0), (0, 2), (0, 0)))            # plane (1,1)
_DECONV_DHDW = (((0, 0),),
                ((0, 0), (0, 1)),
                ((0, 0), (1, 0)),
                ((0, 0), (0, 1), (1, 0), (1, 1)))


def _deconv_kernel(x_ref, w_ref, b_ref, o_ref, *, plan):
    # x_ref: (1, Lp, Cin_p) bf16 ; w_ref: (9*Cin_p, CoT) bf16
    # b_ref: (1, CoT) f32        ; o_ref: (1, 4, M, CoT) bf16
    m = o_ref.shape[2]
    cin = x_ref.shape[2]
    for p, taps in enumerate(plan):                          # 4 planes, static
        acc = None
        for off, widx in taps:                               # live taps only
            d = jnp.dot(x_ref[0, off:off + m, :],
                        w_ref[widx * cin:(widx + 1) * cin, :],
                        preferred_element_type=jnp.float32)
            acc = d if acc is None else acc + d
        o_ref[0, p] = (acc + b_ref[...]).astype(o_ref.dtype)


def _run_deconv(x_flat, slab, bias, *, plan, m):
    n, lp, cin_p = x_flat.shape
    k, cout_p = slab.shape
    co_t = min(cout_p, 256)
    n_co = cout_p // co_t
    kern = functools.partial(_deconv_kernel, plan=plan)
    return pl.pallas_call(
        kern,
        out_shape=jax.ShapeDtypeStruct((n, 4, m, cout_p), jnp.bfloat16),
        grid_spec=pltpu.PrefetchScalarGridSpec(
            num_scalar_prefetch=0,
            grid=(n_co, n),
            in_specs=[
                pl.BlockSpec((1, lp, cin_p), lambda j, b: (b, 0, 0)),
                pl.BlockSpec((k, co_t), lambda j, b: (0, j)),
                pl.BlockSpec((1, co_t), lambda j, b: (0, j)),
            ],
            out_specs=pl.BlockSpec((1, 4, m, co_t), lambda j, b: (b, 0, 0, j)),
        ),
        compiler_params=pltpu.CompilerParams(
            dimension_semantics=("parallel", "parallel"),
            vmem_limit_bytes=_VMEM_LIMIT),
    )(x_flat, slab, bias)


def _deconv3x3s2_packed(x, slab, bias):
    """(N,H,W,Cx) -> (N,2H,2W,Cout_p) bf16."""
    n, h, wd, cx = x.shape
    cin_p = slab.shape[0] // 9
    cout_p = slab.shape[1]
    wp, hp = wd + 1, h + 1
    # Single pad: 1 right / 1 bottom halo + 2 slack rows ((h+3)*wp >= hp*wp + wp + 1).
    xp = jnp.pad(x.astype(jnp.bfloat16),
                 ((0, 0), (0, 3), (0, 1), (0, cin_p - cx)))
    x_flat = xp.reshape(n, (h + 3) * wp, cin_p)
    plan, widx = [], 0
    for dhdw in _DECONV_DHDW:
        taps = []
        for dh, dw in dhdw:
            taps.append((dh * wp + dw, widx))
            widx += 1
        plan.append(tuple(taps))
    out = _run_deconv(x_flat, slab, bias, plan=tuple(plan), m=hp * wp)
    o = out.reshape(n, 2, 2, hp, wp, cout_p)[:, :, :, :h, :wd, :]
    return jnp.transpose(o, (0, 3, 1, 4, 2, 5)).reshape(n, 2 * h, 2 * wd, cout_p)


# -----------------------------------------------------------------------------
# Weight packing (PyTorch layout -> bf16 kernel slabs, lane-dense padding).
# -----------------------------------------------------------------------------
def _pack_conv(w, b):
    """w: Conv2d weight (Cout,Cin,3,3); b: (Cout,) -> (bf16 slab, f32 bias row)."""
    cout, cin = int(w.shape[0]), int(w.shape[1])
    cin_p, cout_p = _pad_ch(cin), _pad_ch(cout)
    wt = jnp.transpose(w, (2, 3, 1, 0))                      # (3,3,Cin,Cout)
    wt = jnp.pad(wt, ((0, 0), (0, 0), (0, cin_p - cin), (0, cout_p - cout)))
    slab = wt.reshape(9 * cin_p, cout_p).astype(jnp.bfloat16)   # tap-major rows
    bias = jnp.pad(b, (0, cout_p - cout)).reshape(1, cout_p).astype(jnp.float32)
    return slab, bias


def _pack_deconv(w_t, b):
    """w_t: ConvTranspose2d weight (Cin,Cout,3,3); b: (Cout,)."""
    cin, cout = int(w_t.shape[0]), int(w_t.shape[1])
    cin_p, cout_p = _pad_ch(cin), _pad_ch(cout)
    blocks = []
    for taps in _DECONV_KHKW:                                # plane-major, live taps only
        for kh, kw in taps:
            blocks.append(jnp.pad(w_t[:, :, kh, kw],
                                  ((0, cin_p - cin), (0, cout_p - cout))))
    slab = jnp.concatenate(blocks, axis=0).astype(jnp.bfloat16)  # (9*Cin_p, Cout_p)
    bias = jnp.pad(b, (0, cout_p - cout)).reshape(1, cout_p).astype(jnp.float32)
    return slab, bias


def conv3x3_same(x, w, b, *, relu):
    slab, bias = _pack_conv(w, b)
    return _conv3x3_packed(x, slab, bias, relu=relu)[..., :w.shape[0]]


def conv_transpose3x3_s2(x, w_t, b):
    slab, bias = _pack_deconv(w_t, b)
    return _deconv3x3s2_packed(x, slab, bias)[..., :w_t.shape[1]]


# -----------------------------------------------------------------------------
# MaxPool2d(2)  (channels are >=128 here, so all lane splits are 128-aligned).
# -----------------------------------------------------------------------------
def _maxpool_kernel(x_ref, o_ref):
    # x_ref: (1, H, W//2, 2C) -- lane dim holds the two horizontal neighbours
    c = o_ref.shape[-1]
    h = x_ref.shape[1]
    v = x_ref[0]
    cmax = jnp.maximum(v[:, :, :c], v[:, :, c:])             # horizontal 2-max
    vr = cmax.reshape(h // 2, 2, cmax.shape[1], c)           # split leading dim only
    o_ref[0] = jnp.maximum(vr[:, 0], vr[:, 1])


def maxpool2(x):
    # TODO(synk): could be folded into the preceding conv's epilogue.
    n, h, w, c = x.shape
    ho, wo = h // 2, w // 2
    xr = x.reshape(n, h, wo, 2 * c)                          # contiguous merge
    return pl.pallas_call(
        _maxpool_kernel,
        out_shape=jax.ShapeDtypeStruct((n, ho, wo, c), x.dtype),
        grid_spec=pltpu.PrefetchScalarGridSpec(
            num_scalar_prefetch=0,
            grid=(n,),
            in_specs=[pl.BlockSpec((1, h, wo, 2 * c), lambda i: (i, 0, 0, 0))],
            out_specs=pl.BlockSpec((1, ho, wo, c), lambda i: (i, 0, 0, 0)),
        ),
        compiler_params=pltpu.CompilerParams(
            dimension_semantics=("parallel",),
            vmem_limit_bytes=_VMEM_LIMIT),
    )(xr)


# -----------------------------------------------------------------------------
# Parameters (He init, zero biases), packing, forward pass.
# -----------------------------------------------------------------------------
def _kaiming_conv(key, cout, cin):
    std = math.sqrt(2.0 / (cin * 9))
    return jax.random.normal(key, (cout, cin, 3, 3), jnp.float32) * std


def _kaiming_convT(key, cin, cout):
    std = math.sqrt(2.0 / (cout * 9))
    return jax.random.normal(key, (cin, cout, 3, 3), jnp.float32) * std


def init_params(key, in_channels=3, out_channels=3):
    keys = iter(jax.random.split(key, 64))
    p = {}

    def enc(name, c_in, c_mid, c_out):
        p[name] = dict(
            w1=_kaiming_conv(next(keys), c_mid, c_in),
            b1=jnp.zeros((c_mid,), jnp.float32),
            w2=_kaiming_conv(next(keys), c_out, c_mid),
            b2=jnp.zeros((c_out,), jnp.float32))

    def dec(name, c_in, c_mid):
        p[name] = dict(
            w1=_kaiming_conv(next(keys), c_mid, c_in),
            b1=jnp.zeros((c_mid,), jnp.float32),
            w2=_kaiming_conv(next(keys), c_mid, c_mid),
            b2=jnp.zeros((c_mid,), jnp.float32),
            wt=_kaiming_convT(next(keys), c_mid, c_mid),
            bt=jnp.zeros((c_mid,), jnp.float32))

    # TODO(synk): _block1's second Conv2d(48,48) mismatches its 64-ch input
    # (PyTorch forward raises); widened to 64->64 so the block is runnable.
    enc("block1", in_channels, 64, 64)
    enc("block2", 64, 128, 128)
    enc("block3", 128, 256, 256)
    enc("block4", 256, 512, 512)
    enc("block5", 512, 1024, 1024)
    dec("block6", 1024, 512)
    dec("block7", 512, 256)
    dec("block8", 256, 128)
    # TODO(synk): _block9's first Conv2d(64, out) mismatches its 128-ch input;
    # corrected to 128 -> out_channels.
    dec("block9", 128, out_channels)
    # TODO(synk): the tail reuses _block5 on a 3-ch tensor; its first conv expects
    # 512 channels, so a separate 3->1024 weight is used for that call only.
    p["block5_tail_w1"] = _kaiming_conv(next(keys), 1024, out_channels)
    return p


def pack_params(params):
    """One-time conversion of PyTorch-layout f32 weights to bf16 kernel slabs."""
    pk = {}
    for nm in ("block1", "block2", "block3", "block4", "block5"):
        p = params[nm]
        pk[nm] = dict(c1=_pack_conv(p["w1"], p["b1"]), c2=_pack_conv(p["w2"], p["b2"]))
    for nm in ("block6", "block7", "block8", "block9"):
        p = params[nm]
        pk[nm] = dict(c1=_pack_conv(p["w1"], p["b1"]), c2=_pack_conv(p["w2"], p["b2"]),
                      ct=_pack_deconv(p["wt"], p["bt"]))
    pk["block5_tail_c1"] = _pack_conv(params["block5_tail_w1"], params["block5"]["b1"])
    return pk


def forward(packed, x_nchw):
    x = jnp.transpose(x_nchw, (0, 2, 3, 1))                  # NCHW -> NHWC

    def enc_block(pk, t):
        t = _conv3x3_packed(t, *pk["c1"], relu=True)
        t = _conv3x3_packed(t, *pk["c2"], relu=True)
        return maxpool2(t)

    def dec_block(pk, t):
        t = _conv3x3_packed(t, *pk["c1"], relu=True)
        t = _conv3x3_packed(t, *pk["c2"], relu=True)
        return _deconv3x3s2_packed(t, *pk["ct"])

    pool1 = enc_block(packed["block1"], x)
    pool2 = enc_block(packed["block2"], pool1)
    pool3 = enc_block(packed["block3"], pool2)
    pool4 = enc_block(packed["block4"], pool3)
    pool5 = enc_block(packed["block5"], pool4)
    up5 = dec_block(packed["block6"], pool5)
    up4 = dec_block(packed["block7"], up5)
    up3 = dec_block(packed["block8"], up4)
    up2 = dec_block(packed["block9"], up3)
    # Tail of the reference forward: upsample1 = _block5(upsample2);
    #                                upsample0 = _block6(upsample1)
    t = _conv3x3_packed(up2, *packed["block5_tail_c1"], relu=True)
    t = _conv3x3_packed(t, *packed["block5"]["c2"], relu=True)
    up1 = maxpool2(t)
    up0 = dec_block(packed["block6"], up1)
    return jnp.transpose(up0, (0, 3, 1, 2)).astype(jnp.float32)   # NHWC -> NCHW


if __name__ == "__main__":
    key = jax.random.PRNGKey(0)
    k_par, k_in = jax.random.split(key)
    params = init_params(k_par, in_channels=3, out_channels=3)
    # 5 MaxPool2d(2) stages -> spatial must be a multiple of 32.
    x = jax.random.normal(k_in, (2, 3, 32, 32), jnp.float32)

    # --- self-check 1: 3x3 conv (bf16 matmul, f32 accum) vs XLA conv ---------
    xc = jax.random.normal(jax.random.PRNGKey(1), (2, 8, 8, 16), jnp.float32)
    wc = jax.random.normal(jax.random.PRNGKey(2), (32, 16, 3, 3), jnp.float32) * 0.1
    bc = jnp.linspace(-1.0, 1.0, 32, dtype=jnp.float32)
    xcb = xc.astype(jnp.bfloat16).astype(jnp.float32)
    wcb = wc.astype(jnp.bfloat16).astype(jnp.float32)
    got = conv3x3_same(xc, wc, bc, relu=True).astype(jnp.float32)
    ref = jax.lax.conv_general_dilated(
        xcb, jnp.transpose(wcb, (2, 3, 1, 0)), (1, 1), "SAME",
        dimension_numbers=("NHWC", "HWIO", "NHWC")) + bc
    ref = jnp.maximum(ref, 0.0)
    assert jnp.allclose(got, ref, atol=5e-2, rtol=5e-2), "conv kernel mismatch"

    # --- self-check 2: live-tap subpixel transpose-conv vs zero-dilated conv --
    wt = jax.random.normal(jax.random.PRNGKey(3), (16, 24, 3, 3), jnp.float32) * 0.1
    bt = jnp.linspace(-0.5, 0.5, 24, dtype=jnp.float32)
    wtb = wt.astype(jnp.bfloat16).astype(jnp.float32)
    got_t = conv_transpose3x3_s2(xc, wt, bt).astype(jnp.float32)
    n_, h_, w_, ci_ = xc.shape
    xd = jnp.zeros((n_, 2 * h_ + 2, 2 * w_ + 2, ci_), jnp.float32)
    xd = xd.at[:, 1:2 * h_:2, 1:2 * w_:2, :].set(xcb)
    wf = wtb[:, :, ::-1, ::-1]
    ref_t = jax.lax.conv_general_dilated(
        xd, jnp.transpose(wf, (2, 3, 0, 1)), (1, 1), "VALID",
        dimension_numbers=("NHWC", "HWIO", "NHWC")) + bt
    assert jnp.allclose(got_t, ref_t, atol=5e-2, rtol=5e-2), "convT kernel mismatch"

    # --- self-check 3: maxpool vs reduce_window ------------------------------
    got_p = maxpool2(xc)
    ref_p = jax.lax.reduce_window(xc, -jnp.inf, jax.lax.max,
                                  (1, 2, 2, 1), (1, 2, 2, 1), "VALID")
    assert jnp.allclose(got_p, ref_p), "maxpool kernel mismatch"

    # --- full forward ---------------------------------------------------------
    packed = pack_params(params)
    out = jax.jit(forward)(packed, x)
    out = jax.block_until_ready(out)
    assert out.shape == (2, 512, 16, 16), out.shape
    print("KERNEL_OK")
</pallas_src>

<mosaic_0001>
module attributes {stable_mosaic.version = 11 : i64} {
  func.func @_conv_kernel(%arg0: i32, %arg1: i32, %arg2: memref<1x130x128xbf16, #tpu.memory_space<vmem>>, %arg3: memref<1152x128xbf16, #tpu.memory_space<vmem>>, %arg4: memref<1x128xf32, #tpu.memory_space<vmem>>, %arg5: memref<1x100x128xbf16, #tpu.memory_space<vmem>>) attributes {dimension_semantics = [#tpu.dimension_semantics<parallel>, #tpu.dimension_semantics<parallel>], iteration_bounds = array<i64: 1, 2>, scalar_prefetch = 0 : i64, scratch_operands = 0 : i64, tpu.core_type = #tpu.core_type<tc>, window_params = [{transform_indices = @transform_0, window_bounds = array<i64: 1, 130, 128>}, {transform_indices = @transform_1, window_bounds = array<i64: 1152, 128>}, {transform_indices = @transform_2, window_bounds = array<i64: 1, 128>}, {transform_indices = @transform_3, window_bounds = array<i64: 1, 100, 128>}]} {
    %c0 = arith.constant 0 : index
    %c0_0 = arith.constant 0 : index
    %c0_1 = arith.constant 0 : index
    %0 = vector.load %arg2[%c0, %c0_0, %c0_1] : memref<1x130x128xbf16, #tpu.memory_space<vmem>>, vector<1x100x128xbf16>
    %1 = vector.shape_cast %0 : vector<1x100x128xbf16> to vector<100x128xbf16>
    %c0_2 = arith.constant 0 : index
    %c0_3 = arith.constant 0 : index
    %2 = vector.load %arg3[%c0_2, %c0_3] : memref<1152x128xbf16, #tpu.memory_space<vmem>>, vector<128x128xbf16>
    %cst = arith.constant dense<0.000000e+00> : vector<100x128xf32>
    %3 = tpu.matmul %1, %2, %cst {dimension_numbers = #tpu.dot_dimension_numbers<[1], [0], [0], [1], [0, 0, 1, 1], [], []>} : vector<100x128xbf16>, vector<128x128xbf16>, vector<100x128xf32> -> vector<100x128xf32>
    %c0_4 = arith.constant 0 : index
    %c1 = arith.constant 1 : index
    %c0_5 = arith.constant 0 : index
    %4 = vector.load %arg2[%c0_4, %c1, %c0_5] : memref<1x130x128xbf16, #tpu.memory_space<vmem>>, vector<1x100x128xbf16>
    %5 = vector.shape_cast %4 : vector<1x100x128xbf16> to vector<100x128xbf16>
    %c128 = arith.constant 128 : index
    %c0_6 = arith.constant 0 : index
    %6 = vector.load %arg3[%c128, %c0_6] : memref<1152x128xbf16, #tpu.memory_space<vmem>>, vector<128x128xbf16>
    %cst_7 = arith.constant dense<0.000000e+00> : vector<100x128xf32>
    %7 = tpu.matmul %5, %6, %cst_7 {dimension_numbers = #tpu.dot_dimension_numbers<[1], [0], [0], [1], [0, 0, 1, 1], [], []>} : vector<100x128xbf16>, vector<128x128xbf16>, vector<100x128xf32> -> vector<100x128xf32>
    %8 = arith.addf %3, %7 : vector<100x128xf32>
    %c0_8 = arith.constant 0 : index
    %c2 = arith.constant 2 : index
    %c0_9 = arith.constant 0 : index
    %9 = vector.load %arg2[%c0_8, %c2, %c0_9] : memref<1x130x128xbf16, #tpu.memory_space<vmem>>, vector<1x100x128xbf16>
    %10 = vector.shape_cast %9 : vector<1x100x128xbf16> to vector<100x128xbf16>
    %c256 = arith.constant 256 : index
    %c0_10 = arith.constant 0 : index
    %11 = vector.load %arg3[%c256, %c0_10] : memref<1152x128xbf16, #tpu.memory_space<vmem>>, vector<128x128xbf16>
    %cst_11 = arith.constant dense<0.000000e+00> : vector<100x128xf32>
    %12 = tpu.matmul %10, %11, %cst_11 {dimension_numbers = #tpu.dot_dimension_numbers<[1], [0], [0], [1], [0, 0, 1, 1], [], []>} : vector<100x128xbf16>, vector<128x128xbf16>, vector<100x128xf32> -> vector<100x128xf32>
    %13 = arith.addf %8, %12 : vector<100x128xf32>
    %c0_12 = arith.constant 0 : index
    %c10 = arith.constant 10 : index
    %c0_13 = arith.constant 0 : index
    %14 = vector.load %arg2[%c0_12, %c10, %c0_13] : memref<1x130x128xbf16, #tpu.memory_space<vmem>>, vector<1x100x128xbf16>
    %15 = vector.shape_cast %14 : vector<1x100x128xbf16> to vector<100x128xbf16>
    %c384 = arith.constant 384 : index
    %c0_14 = arith.constant 0 : index
    %16 = vector.load %arg3[%c384, %c0_14] : memref<1152x128xbf16, #tpu.memory_space<vmem>>, vector<128x128xbf16>
    %cst_15 = arith.constant dense<0.000000e+00> : vector<100x128xf32>
    %17 = tpu.matmul %15, %16, %cst_15 {dimension_numbers = #tpu.dot_dimension_numbers<[1], [0], [0], [1], [0, 0, 1, 1], [], []>} : vector<100x128xbf16>, vector<128x128xbf16>, vector<100x128xf32> -> vector<100x128xf32>
    %18 = arith.addf %13, %17 : vector<100x128xf32>
    %c0_16 = arith.constant 0 : index
    %c11 = arith.constant 11 : index
    %c0_17 = arith.constant 0 : index
    %19 = vector.load %arg2[%c0_16, %c11, %c0_17] : memref<1x130x128xbf16, #tpu.memory_space<vmem>>, vector<1x100x128xbf16>
    %20 = vector.shape_cast %19 : vector<1x100x128xbf16> to vector<100x128xbf16>
    %c512 = arith.constant 512 : index
    %c0_18 = arith.constant 0 : index
    %21 = vector.load %arg3[%c512, %c0_18] : memref<1152x128xbf16, #tpu.memory_space<vmem>>, vector<128x128xbf16>
    %cst_19 = arith.constant dense<0.000000e+00> : vector<100x128xf32>
    %22 = tpu.matmul %20, %21, %cst_19 {dimension_numbers = #tpu.dot_dimension_numbers<[1], [0], [0], [1], [0, 0, 1, 1], [], []>} : vector<100x128xbf16>, vector<128x128xbf16>, vector<100x128xf32> -> vector<100x128xf32>
    %23 = arith.addf %18, %22 : vector<100x128xf32>
    %c0_20 = arith.constant 0 : index
    %c12 = arith.constant 12 : index
    %c0_21 = arith.constant 0 : index
    %24 = vector.load %arg2[%c0_20, %c12, %c0_21] : memref<1x130x128xbf16, #tpu.memory_space<vmem>>, vector<1x100x128xbf16>
    %25 = vector.shape_cast %24 : vector<1x100x128xbf16> to vector<100x128xbf16>
    %c640 = arith.constant 640 : index
    %c0_22 = arith.constant 0 : index
    %26 = vector.load %arg3[%c640, %c0_22] : memref<1152x128xbf16, #tpu.memory_space<vmem>>, vector<128x128xbf16>
    %cst_23 = arith.constant dense<0.000000e+00> : vector<100x128xf32>
    %27 = tpu.matmul %25, %26, %cst_23 {dimension_numbers = #tpu.dot_dimension_numbers<[1], [0], [0], [1], [0, 0, 1, 1], [], []>} : vector<100x128xbf16>, vector<128x128xbf16>, vector<100x128xf32> -> vector<100x128xf32>
    %28 = arith.addf %23, %27 : vector<100x128xf32>
    %c0_24 = arith.constant 0 : index
    %c20 = arith.constant 20 : index
    %c0_25 = arith.constant 0 : index
    %29 = vector.load %arg2[%c0_24, %c20, %c0_25] : memref<1x130x128xbf16, #tpu.memory_space<vmem>>, vector<1x100x128xbf16>
    %30 = vector.shape_cast %29 : vector<1x100x128xbf16> to vector<100x128xbf16>
    %c768 = arith.constant 768 : index
    %c0_26 = arith.constant 0 : index
    %31 = vector.load %arg3[%c768, %c0_26] : memref<1152x128xbf16, #tpu.memory_space<vmem>>, vector<128x128xbf16>
    %cst_27 = arith.constant dense<0.000000e+00> : vector<100x128xf32>
    %32 = tpu.matmul %30, %31, %cst_27 {dimension_numbers = #tpu.dot_dimension_numbers<[1], [0], [0], [1], [0, 0, 1, 1], [], []>} : vector<100x128xbf16>, vector<128x128xbf16>, vector<100x128xf32> -> vector<100x128xf32>
    %33 = arith.addf %28, %32 : vector<100x128xf32>
    %c0_28 = arith.constant 0 : index
    %c21 = arith.constant 21 : index
    %c0_29 = arith.constant 0 : index
    %34 = vector.load %arg2[%c0_28, %c21, %c0_29] : memref<1x130x128xbf16, #tpu.memory_space<vmem>>, vector<1x100x128xbf16>
    %35 = vector.shape_cast %34 : vector<1x100x128xbf16> to vector<100x128xbf16>
    %c896 = arith.constant 896 : index
    %c0_30 = arith.constant 0 : index
    %36 = vector.load %arg3[%c896, %c0_30] : memref<1152x128xbf16, #tpu.memory_space<vmem>>, vector<128x128xbf16>
    %cst_31 = arith.constant dense<0.000000e+00> : vector<100x128xf32>
    %37 = tpu.matmul %35, %36, %cst_31 {dimension_numbers = #tpu.dot_dimension_numbers<[1], [0], [0], [1], [0, 0, 1, 1], [], []>} : vector<100x128xbf16>, vector<128x128xbf16>, vector<100x128xf32> -> vector<100x128xf32>
    %38 = arith.addf %33, %37 : vector<100x128xf32>
    %c0_32 = arith.constant 0 : index
    %c22 = arith.constant 22 : index
    %c0_33 = arith.constant 0 : index
    %39 = vector.load %arg2[%c0_32, %c22, %c0_33] : memref<1x130x128xbf16, #tpu.memory_space<vmem>>, vector<1x100x128xbf16>
    %40 = vector.shape_cast %39 : vector<1x100x128xbf16> to vector<100x128xbf16>
    %c1024 = arith.constant 1024 : index
    %c0_34 = arith.constant 0 : index
    %41 = vector.load %arg3[%c1024, %c0_34] : memref<1152x128xbf16, #tpu.memory_space<vmem>>, vector<128x128xbf16>
    %cst_35 = arith.constant dense<0.000000e+00> : vector<100x128xf32>
    %42 = tpu.matmul %40, %41, %cst_35 {dimension_numbers = #tpu.dot_dimension_numbers<[1], [0], [0], [1], [0, 0, 1, 1], [], []>} : vector<100x128xbf16>, vector<128x128xbf16>, vector<100x128xf32> -> vector<100x128xf32>
    %43 = arith.addf %38, %42 : vector<100x128xf32>
    %c0_36 = arith.constant 0 : index
    %c0_37 = arith.constant 0 : index
    %44 = vector.load %arg4[%c0_36, %c0_37] : memref<1x128xf32, #tpu.memory_space<vmem>>, vector<1x128xf32>
    %45 = vector.broadcast %44 : vector<1x128xf32> to vector<100x128xf32>
    %46 = arith.addf %43, %45 : vector<100x128xf32>
    %cst_38 = arith.constant 0.000000e+00 : f32
    %47 = vector.broadcast %cst_38 : f32 to vector<100x128xf32>
    %48 = arith.maximumf %46, %47 : vector<100x128xf32>
    %49 = arith.truncf %48 : vector<100x128xf32> to vector<100x128xbf16>
    %c0_39 = arith.constant 0 : index
    %c0_40 = arith.constant 0 : index
    %c0_41 = arith.constant 0 : index
    %50 = vector.load %arg5[%c0_39, %c0_40, %c0_41] : memref<1x100x128xbf16, #tpu.memory_space<vmem>>, vector<1x100x128xbf16>
    %51 = vector.shape_cast %50 : vector<1x100x128xbf16> to vector<100x128xbf16>
    %52 = vector.shape_cast %49 : vector<100x128xbf16> to vector<1x100x128xbf16>
    tpu.vector_store %arg5[%c0_39, %c0_40, %c0_41], %52 {strides = array<i32>} : memref<1x100x128xbf16, #tpu.memory_space<vmem>>, vector<1x100x128xbf16>,
    return
  }
  func.func @transform_0(%arg0: i32, %arg1: i32) -> (i32, i32, i32) {
    %c0_i32 = arith.constant 0 : i32
    %c0_i32_0 = arith.constant 0 : i32
    %c0_i32_1 = arith.constant 0 : i32
    return %arg1, %c0_i32, %c0_i32_0 : i32, i32, i32
  }
  func.func @transform_1(%arg0: i32, %arg1: i32) -> (i32, i32) {
    %c0_i32 = arith.constant 0 : i32
    %c0_i32_0 = arith.constant 0 : i32
    return %c0_i32, %arg0 : i32, i32
  }
  func.func @transform_2(%arg0: i32, %arg1: i32) -> (i32, i32) {
    %c0_i32 = arith.constant 0 : i32
    %c0_i32_0 = arith.constant 0 : i32
    return %c0_i32, %arg0 : i32, i32
  }
  func.func @transform_3(%arg0: i32, %arg1: i32) -> (i32, i32, i32) {
    %c0_i32 = arith.constant 0 : i32
    %c0_i32_0 = arith.constant 0 : i32
    return %arg1, %c0_i32, %arg0 : i32, i32, i32
  }
}

</mosaic_0001>

<llo_original>
// kernel: tpu_custom_call.1
$region0: #{tpu_custom_call.1}
  #allocation0 [shape = 'u32[]', space=smem, size = 0x4, offset = 0x4, fixed_abs, tag = 'smem constant byte address 0x4 - core index']
  #allocation1 [shape = 'u32[144,128]{1,0:T(1,128)}', space=vmem, size = 0x12000, scoped, tag = 'internal scratch']
  %s0 = inlined_call_operand.vmem [shape: bf16[2,130,128], index: 0, kind: input, shape index: {}]
  %s1 = inlined_call_operand.hbm [shape: bf16[1152,128], index: 1, kind: input, shape index: {}]
  %s2 = inlined_call_operand.vmem [shape: f32[1,128], index: 2, kind: input, shape index: {}]
  %s3 = inlined_call_operand.vmem [shape: bf16[2,100,128], index: 3, kind: output, shape index: {}]
  %s4 = sld [smem:[#allocation0]]
  $region49: #{tpu_custom_call.1} parent=0
    _
  %s6 = ssub.s32 1, %s4
  %s7 = scalar_select 0, %s6, %s4
  $region1: #{tpu_custom_call.1} parent=0
    #allocation2 [shape = 'u8[294912]{0}', space=vmem, size = 0x48000, scoped, tag = 'input window, operand 1, single buffered']
    #allocation3 [shape = 's32[2]{0}', space=sflag, size = 0x8, scoped, tag = 'scoped memory for tpu_custom_call.1']
    %8 = vsyncpa [#allocation3], 0
    loop: start=0, step=1, limit=4
    $region2: #{tpu_custom_call.1} parent=1 // loop_pre_header
      _
    $region3: #{tpu_custom_call.1} parent=1 // loop_header
      %s10 = sphi 0, %s14
      %p11 = scmp.ge.s32.totalorder %s10, 4
      %s17 = sphi 0, %s29
      %s18 = sphi 0, %s25
      %s19 = sphi 0, %s17
      %s20 = sphi 0, %s18
      %s21 = sphi 0, %s19
      %s22 = sphi 0, %s20
      %s32 = sphi 0, %s34
      %s35 = sphi 0, %s32
      %s36 = sphi 0, %s35
      %s52 = sphi 0, %s36
      %s58 = sphi 0, %s60
      %s61 = sphi 0, %s58
      %s62 = sphi 0, %s61
      %s78 = sphi 0, %s62
      %s84 = sphi 0, %s86
      %s87 = sphi 0, %s84
      %s88 = sphi 0, %s87
      %s104 = sphi 0, %s88
      %s112 = sphi 0, %s114
      %s115 = sphi 0, %s112
      %s116 = sphi 0, %s115
      %s132 = sphi 0, %s116
    $region4: #{tpu_custom_call.1} parent=1 // loop_header_branch
      %13 = sbr.rel (%p11) target = $region8
    $region5: #{tpu_custom_call.1} parent=1 // loop_body
      %s15 = ssub.s32 %s10, 1
      %s16 = ssub.s32 %s10, 2
      %s23 = sadd.s32 1, %s18
      %p24 = scmp.ge.s32.totalorder %s23, 2
      %s25 = scalar_select %p24, 0, %s23
      %s26 = sadd.s32 1, %s17
      %s27 = scalar_select %p24, %s26, %s17
      %p28 = scmp.ge.s32.totalorder %s27, 1
      %s29 = scalar_select %p28, 0, %s27
      %s30 = ssub.s32 %s18, %s25
      %p31 = scmp.eq.s32.totalorder %s30, 0
      %s33 = sadd.s32 %s32, 1
      %s34 = scalar_select %p31, %s32, %s33
      %p37 = pneg %p31
      %p38 = scmp.eq.s32.totalorder %s10, 1
      %p39 = por %p37, %p38
      %p40 = scmp.ne.s32.totalorder %s32, %s35
      %p41 = scmp.eq.s32.totalorder %s10, 0
      %p42 = por %p40, %p41
      %p43 = scmp.ne.s32.totalorder %s32, %s35
      %p44 = scmp.eq.s32.totalorder %s15, 1
      %p45 = por %p43, %p44
      %p46 = scmp.ne.s32.totalorder %s35, %s36
      %p47 = scmp.eq.s32.totalorder %s15, 0
      %p48 = por %p46, %p47
      %p49 = scmp.ne.s32.totalorder %s35, %s36
      %p50 = scmp.eq.s32.totalorder %s16, 1
      %p51 = por %p49, %p50
      %p53 = scmp.ne.s32.totalorder %s36, %s52
      %p54 = scmp.eq.s32.totalorder %s16, 0
      %p55 = por %p53, %p54
      %s56 = ssub.s32 %s17, %s29
      %p57 = scmp.eq.s32.totalorder %s56, 0
      %s59 = sadd.s32 %s58, 1
      %s60 = scalar_select %p57, %s58, %s59
      %p63 = pneg %p57
      %p64 = scmp.eq.s32.totalorder %s10, 1
      %p65 = por %p63, %p64
      %p66 = scmp.ne.s32.totalorder %s58, %s61
      %p67 = scmp.eq.s32.totalorder %s10, 0
      %p68 = por %p66, %p67
      %p69 = scmp.ne.s32.totalorder %s58, %s61
      %p70 = scmp.eq.s32.totalorder %s15, 1
      %p71 = por %p69, %p70
      %p72 = scmp.ne.s32.totalorder %s61, %s62
      %p73 = scmp.eq.s32.totalorder %s15, 0
      %p74 = por %p72, %p73
      %p75 = scmp.ne.s32.totalorder %s61, %s62
      %p76 = scmp.eq.s32.totalorder %s16, 1
      %p77 = por %p75, %p76
      %p79 = scmp.ne.s32.totalorder %s62, %s78
      %p80 = scmp.eq.s32.totalorder %s16, 0
      %p81 = por %p79, %p80
      %s82 = ssub.s32 %s17, %s29
      %p83 = scmp.eq.s32.totalorder %s82, 0
      %s85 = sadd.s32 %s84, 1
      %s86 = scalar_select %p83, %s84, %s85
      %p89 = pneg %p83
      %p90 = scmp.eq.s32.totalorder %s10, 1
      %p91 = por %p89, %p90
      %p92 = scmp.ne.s32.totalorder %s84, %s87
      %p93 = scmp.eq.s32.totalorder %s10, 0
      %p94 = por %p92, %p93
      %p95 = scmp.ne.s32.totalorder %s84, %s87
      %p96 = scmp.eq.s32.totalorder %s15, 1
      %p97 = por %p95, %p96
      %p98 = scmp.ne.s32.totalorder %s87, %s88
      %p99 = scmp.eq.s32.totalorder %s15, 0
      %p100 = por %p98, %p99
      %p101 = scmp.ne.s32.totalorder %s87, %s88
      %p102 = scmp.eq.s32.totalorder %s16, 1
      %p103 = por %p101, %p102
      %p105 = scmp.ne.s32.totalorder %s88, %s104
      %p106 = scmp.eq.s32.totalorder %s16, 0
      %p107 = por %p105, %p106
      %s108 = ssub.s32 %s18, %s25
      %s109 = ssub.s32 %s17, %s29
      %s110 = sor.u32 %s108, %s109
      %p111 = scmp.eq.s32.totalorder %s110, 0
      %s113 = sadd.s32 %s112, 1
      %s114 = scalar_select %p111, %s112, %s113
      %p117 = pneg %p111
      %p118 = scmp.eq.s32.totalorder %s10, 1
      %p119 = por %p117, %p118
      %p120 = scmp.ne.s32.totalorder %s112, %s115
      %p121 = scmp.eq.s32.totalorder %s10, 0
      %p122 = por %p120, %p121
      %p123 = scmp.ne.s32.totalorder %s112, %s115
      %p124 = scmp.eq.s32.totalorder %s15, 1
      %p125 = por %p123, %p124
      %p126 = scmp.ne.s32.totalorder %s115, %s116
      %p127 = scmp.eq.s32.totalorder %s15, 0
      %p128 = por %p126, %p127
      %p129 = scmp.ne.s32.totalorder %s115, %s116
      %p130 = scmp.eq.s32.totalorder %s16, 1
      %p131 = por %p129, %p130
      %p133 = scmp.ne.s32.totalorder %s116, %s132
      %p134 = scmp.eq.s32.totalorder %s16, 0
      %p135 = por %p133, %p134
      %p136 = scmp.le.s32.totalorder 1, %s10
      %p137 = scmp.lt.s32.totalorder %s10, 3
      %p138 = pnand %p136, %p137
      %p139 = pneg %p138
      // Predicated region
      $region9: #{tpu_custom_call.1} parent=5 // pred_check
        _
      $region10: #{tpu_custom_call.1} parent=5 // pred_check_branch
        %141 = sbr.rel (%p138) target = $region12
      $region11: #{tpu_custom_call.1} parent=5 // pred_region
        %s142 = ssub.s32 %s10, 1
        // Predicated region
        $region13: #{tpu_custom_call.1} parent=11 // pred_check
          %p143 = pneg %p74
        $region14: #{tpu_custom_call.1} parent=11 // pred_check_branch
          %145 = sbr.rel (%p143) target = $region16
        $region15: #{tpu_custom_call.1} parent=11 // pred_region
          %s147 = ssub.s32 9216, 9216
          %148 = vsyncadd [#allocation3], %s147
          %s149 = smul.addr %s19, 64
          %s150 = scalar_lea.hbm %s1, %s149
          %s151 = sshll.u32 [#allocation2], 4
          %s152 = int_to_ptr.vmem [resolvable:$true] %s151
          %157 = dma.hbm_to_vmem [thread:$0]  %s150, 9216, %s152, [#allocation3], 64, 64, 4
        $region16: #{tpu_custom_call.1} parent=11 // pred_fallthru
          _
        // Predicated region
        $region17: #{tpu_custom_call.1} parent=11 // pred_check
          %p158 = pneg %p100
        $region18: #{tpu_custom_call.1} parent=11 // pred_check_branch
          %160 = sbr.rel (%p158) target = $region20
        $region19: #{tpu_custom_call.1} parent=11 // pred_region
          %p161 = scmp.lt.s32.totalorder %s19, 0
          %s162 = scalar_select %p161, %s19, 0
          %s163 = scalar_lea.vmem %s2, %s162
        $region20: #{tpu_custom_call.1} parent=11 // pred_fallthru
          _
      $region12: #{tpu_custom_call.1} parent=5 // pred_fallthru
        _
      %p164 = scmp.lt.s32.totalorder %s10, 2
      // Predicated region
      $region21: #{tpu_custom_call.1} parent=5 // pred_check
        %p165 = pneg %p164
      $region22: #{tpu_custom_call.1} parent=5 // pred_check_branch
        %167 = sbr.rel (%p165) target = $region24
      $region23: #{tpu_custom_call.1} parent=5 // pred_region
        // Predicated region
        $region25: #{tpu_custom_call.1} parent=23 // pred_check
          %p168 = pneg %p42
        $region26: #{tpu_custom_call.1} parent=23 // pred_check_branch
          %170 = sbr.rel (%p168) target = $region28
        $region27: #{tpu_custom_call.1} parent=23 // pred_region
          %p171 = scmp.lt.s32.totalorder %s18, 1
          %s172 = scalar_select %p171, %s18, 1
          %s173 = smul.addr %s172, 17
          %s174 = smul.addr %s173, 4
          %s175 = scalar_lea.vmem %s0, %s174
        $region28: #{tpu_custom_call.1} parent=23 // pred_fallthru
          _
      $region24: #{tpu_custom_call.1} parent=5 // pred_fallthru
        _
      %p176 = scmp.le.s32.totalorder 1, %s10
      %p177 = scmp.lt.s32.totalorder %s10, 3
      %p178 = pnand %p176, %p177
      %p179 = pneg %p178
      // Predicated region
      $region29: #{tpu_custom_call.1} parent=5 // pred_check
        _
      $region30: #{tpu_custom_call.1} parent=5 // pred_check_branch
        %181 = sbr.rel (%p178) target = $region32
      $region31: #{tpu_custom_call.1} parent=5 // pred_region
        %s182 = ssub.s32 %s10, 1
        // Predicated region
        $region33: #{tpu_custom_call.1} parent=31 // pred_check
          %p183 = pneg %p74
        $region34: #{tpu_custom_call.1} parent=31 // pred_check_branch
          %185 = sbr.rel (%p183) target = $region36
        $region35: #{tpu_custom_call.1} parent=31 // pred_region
          %186 = dma.done [#allocation3], 9216
        $region36: #{tpu_custom_call.1} parent=31 // pred_fallthru
          _
        %p187 = scmp.lt.s32.totalorder %s20, 1
        %s188 = scalar_select %p187, %s20, 1
        %s189 = smul.addr %s188, 17
        %s190 = smul.addr %s189, 4
        %s191 = scalar_lea.vmem %s0, %s190
        %p192 = pneg %p48
        %p193 = pneg %p45
        %p194 = pneg %p74
        %p195 = pneg %p71
        %p196 = scmp.lt.s32.totalorder %s19, 0
        %s197 = scalar_select %p196, %s19, 0
        %s198 = scalar_lea.vmem %s2, %s197
        %p199 = pneg %p100
        %p200 = pneg %p97
        %p201 = pneg %p128
        %p202 = pneg %p125
        %p203 = scmp.lt.s32.totalorder %s20, 1
        %s204 = scalar_select %p203, %s20, 1
        %p205 = scmp.lt.s32.totalorder %s19, 0
        %s206 = scalar_select %p205, %s19, 0
        %s207 = smul.addr %s204, 13
        %s208 = sadd.s32 %s206, %s207
        %s209 = smul.addr %s208, 4
        %s210 = scalar_lea.vmem %s3, %s209
        %p211 = scmp.lt.s32.totalorder %s20, 1
        %s212 = scalar_select %p211, %s20, 1
        %s213 = smul.addr %s212, 17
        %s214 = smul.addr %s213, 4
        %s215 = scalar_lea.vmem %s0, %s214
        %p216 = scmp.lt.s32.totalorder %s19, 0
        %s217 = scalar_select %p216, %s19, 0
        %s218 = scalar_lea.vmem %s2, %s217
        %p219 = scmp.lt.s32.totalorder %s20, 1
        %s220 = scalar_select %p219, %s20, 1
        %p221 = scmp.lt.s32.totalorder %s19, 0
        %s222 = scalar_select %p221, %s19, 0
        %s223 = smul.addr %s220, 13
        %s224 = sadd.s32 %s222, %s223
        %s225 = smul.addr %s224, 4
        %s226 = scalar_lea.vmem %s3, %s225
        %v228 = vld [vmem:[%s215] sm:$0xf]
        %v229 = vld [vmem:[%s215 + $0x4] sm:$0xf]
        %v230 = vld [vmem:[%s215 + $0x8] sm:$0xf]
        %v231 = vld [vmem:[%s215 + $0xc] sm:$0xf]
        %v232 = vld [vmem:[%s215 + $0x10] sm:$0xf]
        %v233 = vld [vmem:[%s215 + $0x14] sm:$0xf]
        %v234 = vld [vmem:[%s215 + $0x18] sm:$0xf]
        %v235 = vld [vmem:[%s215 + $0x1c] sm:$0xf]
        %v236 = vld [vmem:[%s215 + $0x20] sm:$0xf]
        %v237 = vld [vmem:[%s215 + $0x24] sm:$0xf]
        %v238 = vld [vmem:[%s215 + $0x28] sm:$0xf]
        %v239 = vld [vmem:[%s215 + $0x2c] sm:$0xf]
        %v240 = vld [vmem:[%s215 + $0x30] sm:$0x3]
        %v241 = vld [vmem:[#allocation2] sm:$0xf]
        %v242 = vld [vmem:[#allocation2 + $0x4] sm:$0xf]
        %v243 = vld [vmem:[#allocation2 + $0x8] sm:$0xf]
        %v244 = vld [vmem:[#allocation2 + $0xc] sm:$0xf]
        %v245 = vld [vmem:[#allocation2 + $0x10] sm:$0xf]
        %v246 = vld [vmem:[#allocation2 + $0x14] sm:$0xf]
        %v247 = vld [vmem:[#allocation2 + $0x18] sm:$0xf]
        %v248 = vld [vmem:[#allocation2 + $0x1c] sm:$0xf]
        %v249 = vld [vmem:[#allocation2 + $0x20] sm:$0xf]
        %v250 = vld [vmem:[#allocation2 + $0x24] sm:$0xf]
        %v251 = vld [vmem:[#allocation2 + $0x28] sm:$0xf]
        %v252 = vld [vmem:[#allocation2 + $0x2c] sm:$0xf]
        %v253 = vld [vmem:[#allocation2 + $0x30] sm:$0xf]
        %v254 = vld [vmem:[#allocation2 + $0x34] sm:$0xf]
        %v255 = vld [vmem:[#allocation2 + $0x38] sm:$0xf]
        %v256 = vld [vmem:[#allocation2 + $0x3c] sm:$0xf]
        %v257 = vld [vmem:[%s215 + $0x30] sm:$0x7]
        %v258 = vld [vmem:[#allocation2 + $0x40] sm:$0xf]
        %v259 = vld [vmem:[#allocation2 + $0x44] sm:$0xf]
        %v260 = vld [vmem:[#allocation2 + $0x48] sm:$0xf]
        %v261 = vld [vmem:[#allocation2 + $0x4c] sm:$0xf]
        %v262 = vld [vmem:[#allocation2 + $0x50] sm:$0xf]
        %v263 = vld [vmem:[#allocation2 + $0x54] sm:$0xf]
        %v264 = vld [vmem:[#allocation2 + $0x58] sm:$0xf]
        %v265 = vld [vmem:[#allocation2 + $0x5c] sm:$0xf]
        %v266 = vld [vmem:[#allocation2 + $0x60] sm:$0xf]
        %v267 = vld [vmem:[#allocation2 + $0x64] sm:$0xf]
        %v268 = vld [vmem:[#allocation2 + $0x68] sm:$0xf]
        %v269 = vld [vmem:[#allocation2 + $0x6c] sm:$0xf]
        %v270 = vld [vmem:[#allocation2 + $0x70] sm:$0xf]
        %v271 = vld [vmem:[#allocation2 + $0x74] sm:$0xf]
        %v272 = vld [vmem:[#allocation2 + $0x78] sm:$0xf]
        %v273 = vld [vmem:[#allocation2 + $0x7c] sm:$0xf]
        %v287 = vunpack.c.l.b16 %v228
        %v288 = vunpack.c.l.b16 %v229
        %v289 = vunpack.c.l.b16 %v230
        %v290 = vunpack.c.l.b16 %v231
        %v291 = vunpack.c.l.b16 %v232
        %v292 = vunpack.c.l.b16 %v233
        %v293 = vunpack.c.l.b16 %v234
        %v294 = vunpack.c.l.b16 %v235
        %v295 = vunpack.c.l.b16 %v236
        %v296 = vunpack.c.l.b16 %v237
        %v297 = vunpack.c.l.b16 %v238
        %v298 = vunpack.c.l.b16 %v239
        %v299 = vunpack.c.l.b16 %v257
        %v300 = vpack.c.b16 %v288, %v287
        %v301 = vpack.c.b16 %v290, %v289
        %v302 = vpack.c.b16 %v292, %v291
        %v303 = vpack.c.b16 %v294, %v293
        %v304 = vpack.c.b16 %v296, %v295
        %v305 = vpack.c.b16 %v298, %v297
        %v306 = vpack.c.b16 %v299, %v299
        %vm307 = vsmask.f32 7424
        %v309 = vshrl.u32 %v300, 16
        %v311 = vshll.u32 %v300, 16
        %v313 = vrot.slane %v311, 1
        %v314 = vor.u32 %v309, %v313
        %v316 = vshll.u32 %v301, 16
        %v318 = vrot.slane %v316, 1
        %v319 = vsel %vm307, %v314, %v318
        %v320 = vshrl.u32 %v301, 16
        %v322 = vor.u32 %v320, %v318
        %v324 = vshll.u32 %v302, 16
        %v326 = vrot.slane %v324, 1
        %v327 = vsel %vm307, %v322, %v326
        %v328 = vshrl.u32 %v302, 16
        %v330 = vor.u32 %v328, %v326
        %v332 = vshll.u32 %v303, 16
        %v334 = vrot.slane %v332, 1
        %v335 = vsel %vm307, %v330, %v334
        %v336 = vshrl.u32 %v303, 16
        %v338 = vor.u32 %v336, %v334
        %v340 = vshll.u32 %v304, 16
        %v342 = vrot.slane %v340, 1
        %v343 = vsel %vm307, %v338, %v342
        %v344 = vshrl.u32 %v304, 16
        %v346 = vor.u32 %v344, %v342
        %v348 = vshll.u32 %v305, 16
        %v350 = vrot.slane %v348, 1
        %v351 = vsel %vm307, %v346, %v350
        %v352 = vshrl.u32 %v305, 16
        %v354 = vor.u32 %v352, %v350
        %v356 = vshll.u32 %v306, 16
        %v358 = vrot.slane %v356, 1
        %v359 = vsel %vm307, %v354, %v358
        %v360 = vshrl.u32 %v306, 16
        %v362 = vor.u32 %v360, %v358
        %v386 = vunpack.c.l.b16 %v258
        %v387 = vunpack.c.l.b16 %v259
        %v388 = vunpack.c.l.b16 %v260
        %v389 = vunpack.c.l.b16 %v261
        %v390 = vunpack.c.l.b16 %v262
        %v391 = vunpack.c.l.b16 %v263
        %v392 = vunpack.c.l.b16 %v264
        %v393 = vunpack.c.l.b16 %v265
        %v394 = vunpack.c.l.b16 %v266
        %v395 = vunpack.c.l.b16 %v267
        %v396 = vunpack.c.l.b16 %v268
        %v397 = vunpack.c.l.b16 %v269
        %v398 = vunpack.c.l.b16 %v270
        %v399 = vunpack.c.l.b16 %v271
        %v400 = vunpack.c.l.b16 %v272
        %v401 = vunpack.c.l.b16 %v273
        %v402 = vpack.c.b16 %v387, %v386
        %v403 = vpack.c.b16 %v389, %v388
        %v404 = vpack.c.b16 %v391, %v390
        %v405 = vpack.c.b16 %v393, %v392
        %v406 = vpack.c.b16 %v395, %v394
        %v407 = vpack.c.b16 %v397, %v396
        %v408 = vpack.c.b16 %v399, %v398
        %v409 = vpack.c.b16 %v401, %v400
        %418 = vmatprep.subr.bf16.mxu0 0
        %419 = vmatpush1.bf16.msra.mxu0 %v409
        %420 = vmatprep.subr.bf16.mxu0 0
        %421 = vmatpush1.bf16.msra.mxu0 %v408
        %422 = vmatprep.subr.bf16.mxu0 0
        %423 = vmatpush1.bf16.msra.mxu0 %v407
        %424 = vmatprep.subr.bf16.mxu0 0
        %425 = vmatpush1.bf16.msra.mxu0 %v406
        %426 = vmatprep.subr.bf16.mxu0 0
        %427 = vmatpush1.bf16.msra.mxu0 %v405
        %428 = vmatprep.subr.bf16.mxu0 0
        %429 = vmatpush1.bf16.msra.mxu0 %v404
        %430 = vmatprep.subr.bf16.mxu0 0
        %431 = vmatpush1.bf16.msra.mxu0 %v403
        %432 = vmatprep.subr.bf16.mxu0 0
        %433 = vmatpush1.bf16.msra.mxu0 %v402
        %434 = vmatprep.subr.bf16.mxu0 0
        %435 = vmatpush2.bf16.msra.mxu0 0
        %436 = vmatprep.subr.bf16.mxu0 0
        %437 = vmatpush2.bf16.msra.mxu0 0
        %438 = vmatprep.subr.bf16.mxu0 0
        %439 = vmatpush2.bf16.msra.mxu0 0
        %440 = vmatprep.subr.bf16.mxu0 0
        %441 = vmatpush2.bf16.msra.mxu0 0
        %442 = vmatprep.subr.bf16.mxu0 0
        %443 = vmatpush2.bf16.msra.mxu0 0
        %444 = vmatprep.subr.bf16.mxu0 0
        %445 = vmatpush2.bf16.msra.mxu0 0
        %446 = vmatprep.subr.bf16.mxu0 0
        %447 = vmatpush2.bf16.msra.mxu0 0
        %448 = vmatprep.subr.bf16.mxu0 0
        %449 = vmatpush2.bf16.msra.mxu0 0
        %450 = vmatprep.mubr.bf16.mxu0 0
        %451 = vmatmul.mubr.bf16.gmra.mxu0 %v319
        %v452 = vpop.f32.mrf.mxu0
        %v453 = vadd.f32 0.0, %v452
        %v454 = vpop.f32.mrf.mxu0
        %v455 = vpop.f32.mrf.mxu0
        %v456 = vadd.f32 0.0, %v455
        %v457 = vpop.f32.mrf.mxu0
        %458 = vmatprep.mubr.bf16.mxu0 0
        %459 = vmatmul.mubr.bf16.gmra.mxu0 %v327
        %v460 = vpop.f32.mrf.mxu0
        %v461 = vadd.f32 0.0, %v460
        %v462 = vpop.f32.mrf.mxu0
        %v463 = vpop.f32.mrf.mxu0
        %v464 = vadd.f32 0.0, %v463
        %v465 = vpop.f32.mrf.mxu0
        %466 = vmatprep.mubr.bf16.mxu0 0
        %467 = vmatmul.mubr.bf16.gmra.mxu0 %v335
        %v468 = vpop.f32.mrf.mxu0
        %v469 = vadd.f32 0.0, %v468
        %v470 = vpop.f32.mrf.mxu0
        %v471 = vpop.f32.mrf.mxu0
        %v472 = vadd.f32 0.0, %v471
        %v473 = vpop.f32.mrf.mxu0
        %474 = vmatprep.mubr.bf16.mxu0 0
        %475 = vmatmul.mubr.bf16.gmra.mxu0 %v343
        %v476 = vpop.f32.mrf.mxu0
        %v477 = vadd.f32 0.0, %v476
        %v478 = vpop.f32.mrf.mxu0
        %v479 = vpop.f32.mrf.mxu0
        %v480 = vadd.f32 0.0, %v479
        %v481 = vpop.f32.mrf.mxu0
        %482 = vmatprep.mubr.bf16.mxu0 0
        %483 = vmatmul.mubr.bf16.gmra.mxu0 %v351
        %v484 = vpop.f32.mrf.mxu0
        %v485 = vadd.f32 0.0, %v484
        %v486 = vpop.f32.mrf.mxu0
        %v487 = vpop.f32.mrf.mxu0
        %v488 = vadd.f32 0.0, %v487
        %v489 = vpop.f32.mrf.mxu0
        %490 = vmatprep.mubr.bf16.mxu0 0
        %491 = vmatmul.mubr.bf16.gmra.mxu0 %v359
        %v492 = vpop.f32.mrf.mxu0
        %v493 = vadd.f32 0.0, %v492
        %v494 = vpop.f32.mrf.mxu0
        %v495 = vpop.f32.mrf.mxu0
        %v496 = vadd.f32 0.0, %v495
        %v497 = vpop.f32.mrf.mxu0
        %498 = vmatprep.mubr.bf16.mxu0 0
        %499 = vmatmul.mubr.bf16.gmra.mxu0 %v362
        %v500 = vpop.f32.mrf.mxu0
        %v501 = vadd.f32 0.0, %v500
        %v502 = vpop.f32.mrf.mxu0
        %v503 = vpop.f32.mrf.mxu0
        %v504 = vpop.f32.mrf.mxu0
        %505 = vdwg.mxu0
        %v507 = vunpack.c.l.b16 %v240
        %v508 = vpack.c.b16 %v507, %v507
        %v532 = vunpack.c.l.b16 %v241
        %v533 = vunpack.c.l.b16 %v242
        %v534 = vunpack.c.l.b16 %v243
        %v535 = vunpack.c.l.b16 %v244
        %v536 = vunpack.c.l.b16 %v245
        %v537 = vunpack.c.l.b16 %v246
        %v538 = vunpack.c.l.b16 %v247
        %v539 = vunpack.c.l.b16 %v248
        %v540 = vunpack.c.l.b16 %v249
        %v541 = vunpack.c.l.b16 %v250
        %v542 = vunpack.c.l.b16 %v251
        %v543 = vunpack.c.l.b16 %v252
        %v544 = vunpack.c.l.b16 %v253
        %v545 = vunpack.c.l.b16 %v254
        %v546 = vunpack.c.l.b16 %v255
        %v547 = vunpack.c.l.b16 %v256
        %v548 = vpack.c.b16 %v533, %v532
        %v549 = vpack.c.b16 %v535, %v534
        %v550 = vpack.c.b16 %v537, %v536
        %v551 = vpack.c.b16 %v539, %v538
        %v552 = vpack.c.b16 %v541, %v540
        %v553 = vpack.c.b16 %v543, %v542
        %v554 = vpack.c.b16 %v545, %v544
        %v555 = vpack.c.b16 %v547, %v546
        %564 = vmatprep.subr.bf16.mxu0 0
        %565 = vmatpush1.bf16.msra.mxu0 %v555
        %566 = vmatprep.subr.bf16.mxu0 0
        %567 = vmatpush1.bf16.msra.mxu0 %v554
        %568 = vmatprep.subr.bf16.mxu0 0
        %569 = vmatpush1.bf16.msra.mxu0 %v553
        %570 = vmatprep.subr.bf16.mxu0 0
        %571 = vmatpush1.bf16.msra.mxu0 %v552
        %572 = vmatprep.subr.bf16.mxu0 0
        %573 = vmatpush1.bf16.msra.mxu0 %v551
        %574 = vmatprep.subr.bf16.mxu0 0
        %575 = vmatpush1.bf16.msra.mxu0 %v550
        %576 = vmatprep.subr.bf16.mxu0 0
        %577 = vmatpush1.bf16.msra.mxu0 %v549
        %578 = vmatprep.subr.bf16.mxu0 0
        %579 = vmatpush1.bf16.msra.mxu0 %v548
        %580 = vmatprep.subr.bf16.mxu0 0
        %581 = vmatpush2.bf16.msra.mxu0 0
        %582 = vmatprep.subr.bf16.mxu0 0
        %583 = vmatpush2.bf16.msra.mxu0 0
        %584 = vmatprep.subr.bf16.mxu0 0
        %585 = vmatpush2.bf16.msra.mxu0 0
        %586 = vmatprep.subr.bf16.mxu0 0
        %587 = vmatpush2.bf16.msra.mxu0 0
        %588 = vmatprep.subr.bf16.mxu0 0
        %589 = vmatpush2.bf16.msra.mxu0 0
        %590 = vmatprep.subr.bf16.mxu0 0
        %591 = vmatpush2.bf16.msra.mxu0 0
        %592 = vmatprep.subr.bf16.mxu0 0
        %593 = vmatpush2.bf16.msra.mxu0 0
        %594 = vmatprep.subr.bf16.mxu0 0
        %595 = vmatpush2.bf16.msra.mxu0 0
        %596 = vmatprep.mubr.bf16.mxu0 0
        %597 = vmatmul.mubr.bf16.gmra.mxu0 %v300
        %v598 = vpop.f32.mrf.mxu0
        %v599 = vadd.f32 %v453, %v598
        %v600 = vpop.f32.mrf.mxu0
        %v601 = vpop.f32.mrf.mxu0
        %v602 = vadd.f32 %v456, %v601
        %v603 = vpop.f32.mrf.mxu0
        %604 = vmatprep.mubr.bf16.mxu0 0
        %605 = vmatmul.mubr.bf16.gmra.mxu0 %v301
        %v606 = vpop.f32.mrf.mxu0
        %v607 = vadd.f32 %v461, %v606
        %v608 = vpop.f32.mrf.mxu0
        %v609 = vpop.f32.mrf.mxu0
        %v610 = vadd.f32 %v464, %v609
        %v611 = vpop.f32.mrf.mxu0
        %612 = vmatprep.mubr.bf16.mxu0 0
        %613 = vmatmul.mubr.bf16.gmra.mxu0 %v302
        %v614 = vpop.f32.mrf.mxu0
        %v615 = vadd.f32 %v469, %v614
        %v616 = vpop.f32.mrf.mxu0
        %v617 = vpop.f32.mrf.mxu0
        %v618 = vadd.f32 %v472, %v617
        %v619 = vpop.f32.mrf.mxu0
        %620 = vmatprep.mubr.bf16.mxu0 0
        %621 = vmatmul.mubr.bf16.gmra.mxu0 %v303
        %v622 = vpop.f32.mrf.mxu0
        %v623 = vadd.f32 %v477, %v622
        %v624 = vpop.f32.mrf.mxu0
        %v625 = vpop.f32.mrf.mxu0
        %v626 = vadd.f32 %v480, %v625
        %v627 = vpop.f32.mrf.mxu0
        %628 = vmatprep.mubr.bf16.mxu0 0
        %629 = vmatmul.mubr.bf16.gmra.mxu0 %v304
        %v630 = vpop.f32.mrf.mxu0
        %v631 = vadd.f32 %v485, %v630
        %v632 = vpop.f32.mrf.mxu0
        %v633 = vpop.f32.mrf.mxu0
        %v634 = vadd.f32 %v488, %v633
        %v635 = vpop.f32.mrf.mxu0
        %636 = vmatprep.mubr.bf16.mxu0 0
        %637 = vmatmul.mubr.bf16.gmra.mxu0 %v305
        %v638 = vpop.f32.mrf.mxu0
        %v639 = vadd.f32 %v493, %v638
        %v640 = vpop.f32.mrf.mxu0
        %v641 = vpop.f32.mrf.mxu0
        %v642 = vadd.f32 %v496, %v641
        %v643 = vpop.f32.mrf.mxu0
        %644 = vmatprep.mubr.bf16.mxu0 0
        %645 = vmatmul.mubr.bf16.gmra.mxu0 %v508
        %v646 = vpop.f32.mrf.mxu0
        %v647 = vadd.f32 %v501, %v646
        %v648 = vpop.f32.mrf.mxu0
        %v649 = vpop.f32.mrf.mxu0
        %v650 = vpop.f32.mrf.mxu0
        %651 = vdwg.mxu0
        %v652 = vld [vmem:[%s215] sm:$0xe]
        %v653 = vld [vmem:[#allocation2 + $0x80] sm:$0xf]
        %v654 = vld [vmem:[#allocation2 + $0x84] sm:$0xf]
        %v655 = vld [vmem:[#allocation2 + $0x88] sm:$0xf]
        %v656 = vld [vmem:[#allocation2 + $0x8c] sm:$0xf]
        %v657 = vld [vmem:[#allocation2 + $0x90] sm:$0xf]
        %v658 = vld [vmem:[#allocation2 + $0x94] sm:$0xf]
        %v659 = vld [vmem:[#allocation2 + $0x98] sm:$0xf]
        %v660 = vld [vmem:[#allocation2 + $0x9c] sm:$0xf]
        %v661 = vld [vmem:[#allocation2 + $0xa0] sm:$0xf]
        %v662 = vld [vmem:[#allocation2 + $0xa4] sm:$0xf]
        %v663 = vld [vmem:[#allocation2 + $0xa8] sm:$0xf]
        %v664 = vld [vmem:[#allocation2 + $0xac] sm:$0xf]
        %v665 = vld [vmem:[#allocation2 + $0xb0] sm:$0xf]
        %v666 = vld [vmem:[#allocation2 + $0xb4] sm:$0xf]
        %v667 = vld [vmem:[#allocation2 + $0xb8] sm:$0xf]
        %v668 = vld [vmem:[#allocation2 + $0xbc] sm:$0xf]
        %v670 = vunpack.c.l.b16 %v652
        %v671 = vpack.c.b16 %v288, %v670
        %vm672 = vcmask 1046528
        %v673 = vrot.slane %v671, 1
        %v674 = vrot.slane %v301, 1
        %v675 = vsel %vm672, %v673, %v674
        %v676 = vrot.slane %v302, 1
        %v677 = vsel %vm672, %v674, %v676
        %v678 = vrot.slane %v303, 1
        %v679 = vsel %vm672, %v676, %v678
        %v680 = vrot.slane %v304, 1
        %v681 = vsel %vm672, %v678, %v680
        %v682 = vrot.slane %v305, 1
        %v683 = vsel %vm672, %v680, %v682
        %v684 = vrot.slane %v306, 1
        %v685 = vsel %vm672, %v682, %v684
        %v709 = vunpack.c.l.b16 %v653
        %v710 = vunpack.c.l.b16 %v654
        %v711 = vunpack.c.l.b16 %v655
        %v712 = vunpack.c.l.b16 %v656
        %v713 = vunpack.c.l.b16 %v657
        %v714 = vunpack.c.l.b16 %v658
        %v715 = vunpack.c.l.b16 %v659
        %v716 = vunpack.c.l.b16 %v660
        %v717 = vunpack.c.l.b16 %v661
        %v718 = vunpack.c.l.b16 %v662
        %v719 = vunpack.c.l.b16 %v663
        %v720 = vunpack.c.l.b16 %v664
        %v721 = vunpack.c.l.b16 %v665
        %v722 = vunpack.c.l.b16 %v666
        %v723 = vunpack.c.l.b16 %v667
        %v724 = vunpack.c.l.b16 %v668
        %v725 = vpack.c.b16 %v710, %v709
        %v726 = vpack.c.b16 %v712, %v711
        %v727 = vpack.c.b16 %v714, %v713
        %v728 = vpack.c.b16 %v716, %v715
        %v729 = vpack.c.b16 %v718, %v717
        %v730 = vpack.c.b16 %v720, %v719
        %v731 = vpack.c.b16 %v722, %v721
        %v732 = vpack.c.b16 %v724, %v723
        %741 = vmatprep.subr.bf16.mxu0 0
        %742 = vmatpush1.bf16.msra.mxu0 %v732
        %743 = vmatprep.subr.bf16.mxu0 0
        %744 = vmatpush1.bf16.msra.mxu0 %v731
        %745 = vmatprep.subr.bf16.mxu0 0
        %746 = vmatpush1.bf16.msra.mxu0 %v730
        %747 = vmatprep.subr.bf16.mxu0 0
        %748 = vmatpush1.bf16.msra.mxu0 %v729
        %749 = vmatprep.subr.bf16.mxu0 0
        %750 = vmatpush1.bf16.msra.mxu0 %v728
        %751 = vmatprep.subr.bf16.mxu0 0
        %752 = vmatpush1.bf16.msra.mxu0 %v727
        %753 = vmatprep.subr.bf16.mxu0 0
        %754 = vmatpush1.bf16.msra.mxu0 %v726
        %755 = vmatprep.subr.bf16.mxu0 0
        %756 = vmatpush1.bf16.msra.mxu0 %v725
        %757 = vmatprep.subr.bf16.mxu0 0
        %758 = vmatpush2.bf16.msra.mxu0 0
        %759 = vmatprep.subr.bf16.mxu0 0
        %760 = vmatpush2.bf16.msra.mxu0 0
        %761 = vmatprep.subr.bf16.mxu0 0
        %762 = vmatpush2.bf16.msra.mxu0 0
        %763 = vmatprep.subr.bf16.mxu0 0
        %764 = vmatpush2.bf16.msra.mxu0 0
        %765 = vmatprep.subr.bf16.mxu0 0
        %766 = vmatpush2.bf16.msra.mxu0 0
        %767 = vmatprep.subr.bf16.mxu0 0
        %768 = vmatpush2.bf16.msra.mxu0 0
        %769 = vmatprep.subr.bf16.mxu0 0
        %770 = vmatpush2.bf16.msra.mxu0 0
        %771 = vmatprep.subr.bf16.mxu0 0
        %772 = vmatpush2.bf16.msra.mxu0 0
        %773 = vmatprep.mubr.bf16.mxu0 0
        %774 = vmatmul.mubr.bf16.gmra.mxu0 %v675
        %v775 = vpop.f32.mrf.mxu0
        %v776 = vadd.f32 0.0, %v775
        %v777 = vpop.f32.mrf.mxu0
        %v778 = vpop.f32.mrf.mxu0
        %v779 = vadd.f32 0.0, %v778
        %v780 = vpop.f32.mrf.mxu0
        %781 = vmatprep.mubr.bf16.mxu0 0
        %782 = vmatmul.mubr.bf16.gmra.mxu0 %v677
        %v783 = vpop.f32.mrf.mxu0
        %v784 = vadd.f32 0.0, %v783
        %v785 = vpop.f32.mrf.mxu0
        %v786 = vpop.f32.mrf.mxu0
        %v787 = vadd.f32 0.0, %v786
        %v788 = vpop.f32.mrf.mxu0
        %789 = vmatprep.mubr.bf16.mxu0 0
        %790 = vmatmul.mubr.bf16.gmra.mxu0 %v679
        %v791 = vpop.f32.mrf.mxu0
        %v792 = vadd.f32 0.0, %v791
        %v793 = vpop.f32.mrf.mxu0
        %v794 = vpop.f32.mrf.mxu0
        %v795 = vadd.f32 0.0, %v794
        %v796 = vpop.f32.mrf.mxu0
        %797 = vmatprep.mubr.bf16.mxu0 0
        %798 = vmatmul.mubr.bf16.gmra.mxu0 %v681
        %v799 = vpop.f32.mrf.mxu0
        %v800 = vadd.f32 0.0, %v799
        %v801 = vpop.f32.mrf.mxu0
        %v802 = vpop.f32.mrf.mxu0
        %v803 = vadd.f32 0.0, %v802
        %v804 = vpop.f32.mrf.mxu0
        %805 = vmatprep.mubr.bf16.mxu0 0
        %806 = vmatmul.mubr.bf16.gmra.mxu0 %v683
        %v807 = vpop.f32.mrf.mxu0
        %v808 = vadd.f32 0.0, %v807
        %v809 = vpop.f32.mrf.mxu0
        %v810 = vpop.f32.mrf.mxu0
        %v811 = vadd.f32 0.0, %v810
        %v812 = vpop.f32.mrf.mxu0
        %813 = vmatprep.mubr.bf16.mxu0 0
        %814 = vmatmul.mubr.bf16.gmra.mxu0 %v685
        %v815 = vpop.f32.mrf.mxu0
        %v816 = vadd.f32 0.0, %v815
        %v817 = vpop.f32.mrf.mxu0
        %v818 = vpop.f32.mrf.mxu0
        %v819 = vadd.f32 0.0, %v818
        %v820 = vpop.f32.mrf.mxu0
        %821 = vmatprep.mubr.bf16.mxu0 0
        %822 = vmatmul.mubr.bf16.gmra.mxu0 %v684
        %v823 = vpop.f32.mrf.mxu0
        %v824 = vadd.f32 0.0, %v823
        %v825 = vpop.f32.mrf.mxu0
        %v826 = vpop.f32.mrf.mxu0
        %v827 = vpop.f32.mrf.mxu0
        %828 = vdwg.mxu0
        %v829 = vadd.f32 %v599, %v776
        %v830 = vadd.f32 %v602, %v779
        %v831 = vadd.f32 %v607, %v784
        %v832 = vadd.f32 %v610, %v787
        %v833 = vadd.f32 %v615, %v792
        %v834 = vadd.f32 %v618, %v795
        %v835 = vadd.f32 %v623, %v800
        %v836 = vadd.f32 %v626, %v803
        %v837 = vadd.f32 %v631, %v808
        %v838 = vadd.f32 %v634, %v811
        %v839 = vadd.f32 %v639, %v816
        %v840 = vadd.f32 %v642, %v819
        %v841 = vadd.f32 %v647, %v824
        %v842 = vld [vmem:[%s215 + $0x4] sm:$0xe]
        %v843 = vld [vmem:[%s215 + $0x8] sm:$0xf]
        %v844 = vld [vmem:[%s215 + $0xc] sm:$0xf]
        %v845 = vld [vmem:[%s215 + $0x10] sm:$0xf]
        %v846 = vld [vmem:[%s215 + $0x14] sm:$0xf]
        %v847 = vld [vmem:[%s215 + $0x18] sm:$0xf]
        %v848 = vld [vmem:[%s215 + $0x1c] sm:$0xf]
        %v849 = vld [vmem:[%s215 + $0x20] sm:$0xf]
        %v850 = vld [vmem:[%s215 + $0x24] sm:$0xf]
        %v851 = vld [vmem:[%s215 + $0x28] sm:$0xf]
        %v852 = vld [vmem:[%s215 + $0x2c] sm:$0xf]
        %v853 = vld [vmem:[%s215 + $0x30] sm:$0xf]
        %v854 = vld [vmem:[%s215 + $0x34] sm:$0x7]
        %v855 = vld [vmem:[#allocation2 + $0xc0] sm:$0xf]
        %v856 = vld [vmem:[#allocation2 + $0xc4] sm:$0xf]
        %v857 = vld [vmem:[#allocation2 + $0xc8] sm:$0xf]
        %v858 = vld [vmem:[#allocation2 + $0xcc] sm:$0xf]
        %v859 = vld [vmem:[#allocation2 + $0xd0] sm:$0xf]
        %v860 = vld [vmem:[#allocation2 + $0xd4] sm:$0xf]
        %v861 = vld [vmem:[#allocation2 + $0xd8] sm:$0xf]
        %v862 = vld [vmem:[#allocation2 + $0xdc] sm:$0xf]
        %v863 = vld [vmem:[#allocation2 + $0xe0] sm:$0xf]
        %v864 = vld [vmem:[#allocation2 + $0xe4] sm:$0xf]
        %v865 = vld [vmem:[#allocation2 + $0xe8] sm:$0xf]
        %v866 = vld [vmem:[#allocation2 + $0xec] sm:$0xf]
        %v867 = vld [vmem:[#allocation2 + $0xf0] sm:$0xf]
        %v868 = vld [vmem:[#allocation2 + $0xf4] sm:$0xf]
        %v869 = vld [vmem:[#allocation2 + $0xf8] sm:$0xf]
        %v870 = vld [vmem:[#allocation2 + $0xfc] sm:$0xf]
        %v884 = vunpack.c.l.b16 %v842
        %v885 = vunpack.c.l.b16 %v843
        %v886 = vunpack.c.l.b16 %v844
        %v887 = vunpack.c.l.b16 %v845
        %v888 = vunpack.c.l.b16 %v846
        %v889 = vunpack.c.l.b16 %v847
        %v890 = vunpack.c.l.b16 %v848
        %v891 = vunpack.c.l.b16 %v849
        %v892 = vunpack.c.l.b16 %v850
        %v893 = vunpack.c.l.b16 %v851
        %v894 = vunpack.c.l.b16 %v852
        %v895 = vunpack.c.l.b16 %v853
        %v896 = vunpack.c.l.b16 %v854
        %v897 = vpack.c.b16 %v885, %v884
        %v898 = vpack.c.b16 %v887, %v886
        %v899 = vpack.c.b16 %v889, %v888
        %v900 = vpack.c.b16 %v891, %v890
        %v901 = vpack.c.b16 %v893, %v892
        %v902 = vpack.c.b16 %v895, %v894
        %v903 = vpack.c.b16 %v896, %v896
        %v904 = vrot.slane %v897, 1
        %v905 = vrot.slane %v898, 1
        %v906 = vsel %vm672, %v904, %v905
        %v907 = vrot.slane %v899, 1
        %v908 = vsel %vm672, %v905, %v907
        %v909 = vrot.slane %v900, 1
        %v910 = vsel %vm672, %v907, %v909
        %v911 = vrot.slane %v901, 1
        %v912 = vsel %vm672, %v909, %v911
        %v913 = vrot.slane %v902, 1
        %v914 = vsel %vm672, %v911, %v913
        %v915 = vrot.slane %v903, 1
        %v916 = vsel %vm672, %v913, %v915
        %v940 = vunpack.c.l.b16 %v855
        %v941 = vunpack.c.l.b16 %v856
        %v942 = vunpack.c.l.b16 %v857
        %v943 = vunpack.c.l.b16 %v858
        %v944 = vunpack.c.l.b16 %v859
        %v945 = vunpack.c.l.b16 %v860
        %v946 = vunpack.c.l.b16 %v861
        %v947 = vunpack.c.l.b16 %v862
        %v948 = vunpack.c.l.b16 %v863
        %v949 = vunpack.c.l.b16 %v864
        %v950 = vunpack.c.l.b16 %v865
        %v951 = vunpack.c.l.b16 %v866
        %v952 = vunpack.c.l.b16 %v867
        %v953 = vunpack.c.l.b16 %v868
        %v954 = vunpack.c.l.b16 %v869
        %v955 = vunpack.c.l.b16 %v870
        %v956 = vpack.c.b16 %v941, %v940
        %v957 = vpack.c.b16 %v943, %v942
        %v958 = vpack.c.b16 %v945, %v944
        %v959 = vpack.c.b16 %v947, %v946
        %v960 = vpack.c.b16 %v949, %v948
        %v961 = vpack.c.b16 %v951, %v950
        %v962 = vpack.c.b16 %v953, %v952
        %v963 = vpack.c.b16 %v955, %v954
        %972 = vmatprep.subr.bf16.mxu0 0
        %973 = vmatpush1.bf16.msra.mxu0 %v963
        %974 = vmatprep.subr.bf16.mxu0 0
        %975 = vmatpush1.bf16.msra.mxu0 %v962
        %976 = vmatprep.subr.bf16.mxu0 0
        %977 = vmatpush1.bf16.msra.mxu0 %v961
        %978 = vmatprep.subr.bf16.mxu0 0
        %979 = vmatpush1.bf16.msra.mxu0 %v960
        %980 = vmatprep.subr.bf16.mxu0 0
        %981 = vmatpush1.bf16.msra.mxu0 %v959
        %982 = vmatprep.subr.bf16.mxu0 0
        %983 = vmatpush1.bf16.msra.mxu0 %v958
        %984 = vmatprep.subr.bf16.mxu0 0
        %985 = vmatpush1.bf16.msra.mxu0 %v957
        %986 = vmatprep.subr.bf16.mxu0 0
        %987 = vmatpush1.bf16.msra.mxu0 %v956
        %988 = vmatprep.subr.bf16.mxu0 0
        %989 = vmatpush2.bf16.msra.mxu0 0
        %990 = vmatprep.subr.bf16.mxu0 0
        %991 = vmatpush2.bf16.msra.mxu0 0
        %992 = vmatprep.subr.bf16.mxu0 0
        %993 = vmatpush2.bf16.msra.mxu0 0
        %994 = vmatprep.subr.bf16.mxu0 0
        %995 = vmatpush2.bf16.msra.mxu0 0
        %996 = vmatprep.subr.bf16.mxu0 0
        %997 = vmatpush2.bf16.msra.mxu0 0
        %998 = vmatprep.subr.bf16.mxu0 0
        %999 = vmatpush2.bf16.msra.mxu0 0
        %1000 = vmatprep.subr.bf16.mxu0 0
        %1001 = vmatpush2.bf16.msra.mxu0 0
        %1002 = vmatprep.subr.bf16.mxu0 0
        %1003 = vmatpush2.bf16.msra.mxu0 0
        %1004 = vmatprep.mubr.bf16.mxu0 0
        %1005 = vmatmul.mubr.bf16.gmra.mxu0 %v906
        %v1006 = vpop.f32.mrf.mxu0
        %v1007 = vadd.f32 0.0, %v1006
        %v1008 = vpop.f32.mrf.mxu0
        %v1009 = vpop.f32.mrf.mxu0
        %v1010 = vadd.f32 0.0, %v1009
        %v1011 = vpop.f32.mrf.mxu0
        %1012 = vmatprep.mubr.bf16.mxu0 0
        %1013 = vmatmul.mubr.bf16.gmra.mxu0 %v908
        %v1014 = vpop.f32.mrf.mxu0
        %v1015 = vadd.f32 0.0, %v1014
        %v1016 = vpop.f32.mrf.mxu0
        %v1017 = vpop.f32.mrf.mxu0
        %v1018 = vadd.f32 0.0, %v1017
        %v1019 = vpop.f32.mrf.mxu0
        %1020 = vmatprep.mubr.bf16.mxu0 0
        %1021 = vmatmul.mubr.bf16.gmra.mxu0 %v910
        %v1022 = vpop.f32.mrf.mxu0
        %v1023 = vadd.f32 0.0, %v1022
        %v1024 = vpop.f32.mrf.mxu0
        %v1025 = vpop.f32.mrf.mxu0
        %v1026 = vadd.f32 0.0, %v1025
        %v1027 = vpop.f32.mrf.mxu0
        %1028 = vmatprep.mubr.bf16.mxu0 0
        %1029 = vmatmul.mubr.bf16.gmra.mxu0 %v912
        %v1030 = vpop.f32.mrf.mxu0
        %v1031 = vadd.f32 0.0, %v1030
        %v1032 = vpop.f32.mrf.mxu0
        %v1033 = vpop.f32.mrf.mxu0
        %v1034 = vadd.f32 0.0, %v1033
        %v1035 = vpop.f32.mrf.mxu0
        %1036 = vmatprep.mubr.bf16.mxu0 0
        %1037 = vmatmul.mubr.bf16.gmra.mxu0 %v914
        %v1038 = vpop.f32.mrf.mxu0
        %v1039 = vadd.f32 0.0, %v1038
        %v1040 = vpop.f32.mrf.mxu0
        %v1041 = vpop.f32.mrf.mxu0
        %v1042 = vadd.f32 0.0, %v1041
        %v1043 = vpop.f32.mrf.mxu0
        %1044 = vmatprep.mubr.bf16.mxu0 0
        %1045 = vmatmul.mubr.bf16.gmra.mxu0 %v916
        %v1046 = vpop.f32.mrf.mxu0
        %v1047 = vadd.f32 0.0, %v1046
        %v1048 = vpop.f32.mrf.mxu0
        %v1049 = vpop.f32.mrf.mxu0
        %v1050 = vadd.f32 0.0, %v1049
        %v1051 = vpop.f32.mrf.mxu0
        %1052 = vmatprep.mubr.bf16.mxu0 0
        %1053 = vmatmul.mubr.bf16.gmra.mxu0 %v915
        %v1054 = vpop.f32.mrf.mxu0
        %v1055 = vadd.f32 0.0, %v1054
        %v1056 = vpop.f32.mrf.mxu0
        %v1057 = vpop.f32.mrf.mxu0
        %v1058 = vpop.f32.mrf.mxu0
        %1059 = vdwg.mxu0
        %v1060 = vadd.f32 %v829, %v1007
        %v1061 = vadd.f32 %v830, %v1010
        %v1062 = vadd.f32 %v831, %v1015
        %v1063 = vadd.f32 %v832, %v1018
        %v1064 = vadd.f32 %v833, %v1023
        %v1065 = vadd.f32 %v834, %v1026
        %v1066 = vadd.f32 %v835, %v1031
        %v1067 = vadd.f32 %v836, %v1034
        %v1068 = vadd.f32 %v837, %v1039
        %v1069 = vadd.f32 %v838, %v1042
        %v1070 = vadd.f32 %v839, %v1047
        %v1071 = vadd.f32 %v840, %v1050
        %v1072 = vadd.f32 %v841, %v1055
        %v1073 = vld [vmem:[%s215 + $0x34] sm:$0xf]
        %v1074 = vld [vmem:[#allocation2 + $0x100] sm:$0xf]
        %v1075 = vld [vmem:[#allocation2 + $0x104] sm:$0xf]
        %v1076 = vld [vmem:[#allocation2 + $0x108] sm:$0xf]
        %v1077 = vld [vmem:[#allocation2 + $0x10c] sm:$0xf]
        %v1078 = vld [vmem:[#allocation2 + $0x110] sm:$0xf]
        %v1079 = vld [vmem:[#allocation2 + $0x114] sm:$0xf]
        %v1080 = vld [vmem:[#allocation2 + $0x118] sm:$0xf]
        %v1081 = vld [vmem:[#allocation2 + $0x11c] sm:$0xf]
        %v1082 = vld [vmem:[#allocation2 + $0x120] sm:$0xf]
        %v1083 = vld [vmem:[#allocation2 + $0x124] sm:$0xf]
        %v1084 = vld [vmem:[#allocation2 + $0x128] sm:$0xf]
        %v1085 = vld [vmem:[#allocation2 + $0x12c] sm:$0xf]
        %v1086 = vld [vmem:[#allocation2 + $0x130] sm:$0xf]
        %v1087 = vld [vmem:[#allocation2 + $0x134] sm:$0xf]
        %v1088 = vld [vmem:[#allocation2 + $0x138] sm:$0xf]
        %v1089 = vld [vmem:[#allocation2 + $0x13c] sm:$0xf]
        %v1091 = vunpack.c.l.b16 %v1073
        %v1092 = vpack.c.b16 %v1091, %v1091
        %vm1093 = vsmask.f32 6400
        %v1095 = vshrl.u32 %v897, 16
        %v1097 = vrot.slane %v1095, 1
        %v1098 = vshll.u32 %v897, 16
        %v1100 = vrot.slane %v1098, 2
        %v1101 = vor.u32 %v1097, %v1100
        %v1103 = vshrl.u32 %v898, 16
        %v1105 = vrot.slane %v1103, 1
        %v1106 = vshll.u32 %v898, 16
        %v1108 = vrot.slane %v1106, 2
        %v1109 = vor.u32 %v1105, %v1108
        %v1110 = vsel %vm1093, %v1101, %v1109
        %v1112 = vshrl.u32 %v899, 16
        %v1114 = vrot.slane %v1112, 1
        %v1115 = vshll.u32 %v899, 16
        %v1117 = vrot.slane %v1115, 2
        %v1118 = vor.u32 %v1114, %v1117
        %v1119 = vsel %vm1093, %v1109, %v1118
        %v1121 = vshrl.u32 %v900, 16
        %v1123 = vrot.slane %v1121, 1
        %v1124 = vshll.u32 %v900, 16
        %v1126 = vrot.slane %v1124, 2
        %v1127 = vor.u32 %v1123, %v1126
        %v1128 = vsel %vm1093, %v1118, %v1127
        %v1130 = vshrl.u32 %v901, 16
        %v1132 = vrot.slane %v1130, 1
        %v1133 = vshll.u32 %v901, 16
        %v1135 = vrot.slane %v1133, 2
        %v1136 = vor.u32 %v1132, %v1135
        %v1137 = vsel %vm1093, %v1127, %v1136
        %v1139 = vshrl.u32 %v902, 16
        %v1141 = vrot.slane %v1139, 1
        %v1142 = vshll.u32 %v902, 16
        %v1144 = vrot.slane %v1142, 2
        %v1145 = vor.u32 %v1141, %v1144
        %v1146 = vsel %vm1093, %v1136, %v1145
        %v1148 = vshrl.u32 %v1092, 16
        %v1150 = vrot.slane %v1148, 1
        %v1151 = vshll.u32 %v1092, 16
        %v1153 = vrot.slane %v1151, 2
        %v1154 = vor.u32 %v1150, %v1153
        %v1155 = vsel %vm1093, %v1145, %v1154
        %v1179 = vunpack.c.l.b16 %v1074
        %v1180 = vunpack.c.l.b16 %v1075
        %v1181 = vunpack.c.l.b16 %v1076
        %v1182 = vunpack.c.l.b16 %v1077
        %v1183 = vunpack.c.l.b16 %v1078
        %v1184 = vunpack.c.l.b16 %v1079
        %v1185 = vunpack.c.l.b16 %v1080
        %v1186 = vunpack.c.l.b16 %v1081
        %v1187 = vunpack.c.l.b16 %v1082
        %v1188 = vunpack.c.l.b16 %v1083
        %v1189 = vunpack.c.l.b16 %v1084
        %v1190 = vunpack.c.l.b16 %v1085
        %v1191 = vunpack.c.l.b16 %v1086
        %v1192 = vunpack.c.l.b16 %v1087
        %v1193 = vunpack.c.l.b16 %v1088
        %v1194 = vunpack.c.l.b16 %v1089
        %v1195 = vpack.c.b16 %v1180, %v1179
        %v1196 = vpack.c.b16 %v1182, %v1181
        %v1197 = vpack.c.b16 %v1184, %v1183
        %v1198 = vpack.c.b16 %v1186, %v1185
        %v1199 = vpack.c.b16 %v1188, %v1187
        %v1200 = vpack.c.b16 %v1190, %v1189
        %v1201 = vpack.c.b16 %v1192, %v1191
        %v1202 = vpack.c.b16 %v1194, %v1193
        %1211 = vmatprep.subr.bf16.mxu0 0
        %1212 = vmatpush1.bf16.msra.mxu0 %v1202
        %1213 = vmatprep.subr.bf16.mxu0 0
        %1214 = vmatpush1.bf16.msra.mxu0 %v1201
        %1215 = vmatprep.subr.bf16.mxu0 0
        %1216 = vmatpush1.bf16.msra.mxu0 %v1200
        %1217 = vmatprep.subr.bf16.mxu0 0
        %1218 = vmatpush1.bf16.msra.mxu0 %v1199
        %1219 = vmatprep.subr.bf16.mxu0 0
        %1220 = vmatpush1.bf16.msra.mxu0 %v1198
        %1221 = vmatprep.subr.bf16.mxu0 0
        %1222 = vmatpush1.bf16.msra.mxu0 %v1197
        %1223 = vmatprep.subr.bf16.mxu0 0
        %1224 = vmatpush1.bf16.msra.mxu0 %v1196
        %1225 = vmatprep.subr.bf16.mxu0 0
        %1226 = vmatpush1.bf16.msra.mxu0 %v1195
        %1227 = vmatprep.subr.bf16.mxu0 0
        %1228 = vmatpush2.bf16.msra.mxu0 0
        %1229 = vmatprep.subr.bf16.mxu0 0
        %1230 = vmatpush2.bf16.msra.mxu0 0
        %1231 = vmatprep.subr.bf16.mxu0 0
        %1232 = vmatpush2.bf16.msra.mxu0 0
        %1233 = vmatprep.subr.bf16.mxu0 0
        %1234 = vmatpush2.bf16.msra.mxu0 0
        %1235 = vmatprep.subr.bf16.mxu0 0
        %1236 = vmatpush2.bf16.msra.mxu0 0
        %1237 = vmatprep.subr.bf16.mxu0 0
        %1238 = vmatpush2.bf16.msra.mxu0 0
        %1239 = vmatprep.subr.bf16.mxu0 0
        %1240 = vmatpush2.bf16.msra.mxu0 0
        %1241 = vmatprep.subr.bf16.mxu0 0
        %1242 = vmatpush2.bf16.msra.mxu0 0
        %1243 = vmatprep.mubr.bf16.mxu0 0
        %1244 = vmatmul.mubr.bf16.gmra.mxu0 %v1110
        %v1245 = vpop.f32.mrf.mxu0
        %v1246 = vadd.f32 0.0, %v1245
        %v1247 = vpop.f32.mrf.mxu0
        %v1248 = vpop.f32.mrf.mxu0
        %v1249 = vadd.f32 0.0, %v1248
        %v1250 = vpop.f32.mrf.mxu0
        %1251 = vmatprep.mubr.bf16.mxu0 0
        %1252 = vmatmul.mubr.bf16.gmra.mxu0 %v1119
        %v1253 = vpop.f32.mrf.mxu0
        %v1254 = vadd.f32 0.0, %v1253
        %v1255 = vpop.f32.mrf.mxu0
        %v1256 = vpop.f32.mrf.mxu0
        %v1257 = vadd.f32 0.0, %v1256
        %v1258 = vpop.f32.mrf.mxu0
        %1259 = vmatprep.mubr.bf16.mxu0 0
        %1260 = vmatmul.mubr.bf16.gmra.mxu0 %v1128
        %v1261 = vpop.f32.mrf.mxu0
        %v1262 = vadd.f32 0.0, %v1261
        %v1263 = vpop.f32.mrf.mxu0
        %v1264 = vpop.f32.mrf.mxu0
        %v1265 = vadd.f32 0.0, %v1264
        %v1266 = vpop.f32.mrf.mxu0
        %1267 = vmatprep.mubr.bf16.mxu0 0
        %1268 = vmatmul.mubr.bf16.gmra.mxu0 %v1137
        %v1269 = vpop.f32.mrf.mxu0
        %v1270 = vadd.f32 0.0, %v1269
        %v1271 = vpop.f32.mrf.mxu0
        %v1272 = vpop.f32.mrf.mxu0
        %v1273 = vadd.f32 0.0, %v1272
        %v1274 = vpop.f32.mrf.mxu0
        %1275 = vmatprep.mubr.bf16.mxu0 0
        %1276 = vmatmul.mubr.bf16.gmra.mxu0 %v1146
        %v1277 = vpop.f32.mrf.mxu0
        %v1278 = vadd.f32 0.0, %v1277
        %v1279 = vpop.f32.mrf.mxu0
        %v1280 = vpop.f32.mrf.mxu0
        %v1281 = vadd.f32 0.0, %v1280
        %v1282 = vpop.f32.mrf.mxu0
        %1283 = vmatprep.mubr.bf16.mxu0 0
        %1284 = vmatmul.mubr.bf16.gmra.mxu0 %v1155
        %v1285 = vpop.f32.mrf.mxu0
        %v1286 = vadd.f32 0.0, %v1285
        %v1287 = vpop.f32.mrf.mxu0
        %v1288 = vpop.f32.mrf.mxu0
        %v1289 = vadd.f32 0.0, %v1288
        %v1290 = vpop.f32.mrf.mxu0
        %1291 = vmatprep.mubr.bf16.mxu0 0
        %1292 = vmatmul.mubr.bf16.gmra.mxu0 %v1154
        %v1293 = vpop.f32.mrf.mxu0
        %v1294 = vadd.f32 0.0, %v1293
        %v1295 = vpop.f32.mrf.mxu0
        %v1296 = vpop.f32.mrf.mxu0
        %v1297 = vpop.f32.mrf.mxu0
        %1298 = vdwg.mxu0
        %v1299 = vadd.f32 %v1060, %v1246
        %v1300 = vadd.f32 %v1061, %v1249
        %v1301 = vadd.f32 %v1062, %v1254
        %v1302 = vadd.f32 %v1063, %v1257
        %v1303 = vadd.f32 %v1064, %v1262
        %v1304 = vadd.f32 %v1065, %v1265
        %v1305 = vadd.f32 %v1066, %v1270
        %v1306 = vadd.f32 %v1067, %v1273
        %v1307 = vadd.f32 %v1068, %v1278
        %v1308 = vadd.f32 %v1069, %v1281
        %v1309 = vadd.f32 %v1070, %v1286
        %v1310 = vadd.f32 %v1071, %v1289
        %v1311 = vadd.f32 %v1072, %v1294
        %v1312 = vld [vmem:[%s215 + $0x4] sm:$0xc]
        %v1313 = vld [vmem:[#allocation2 + $0x140] sm:$0xf]
        %v1314 = vld [vmem:[#allocation2 + $0x144] sm:$0xf]
        %v1315 = vld [vmem:[#allocation2 + $0x148] sm:$0xf]
        %v1316 = vld [vmem:[#allocation2 + $0x14c] sm:$0xf]
        %v1317 = vld [vmem:[#allocation2 + $0x150] sm:$0xf]
        %v1318 = vld [vmem:[#allocation2 + $0x154] sm:$0xf]
        %v1319 = vld [vmem:[#allocation2 + $0x158] sm:$0xf]
        %v1320 = vld [vmem:[#allocation2 + $0x15c] sm:$0xf]
        %v1321 = vld [vmem:[#allocation2 + $0x160] sm:$0xf]
        %v1322 = vld [vmem:[#allocation2 + $0x164] sm:$0xf]
        %v1323 = vld [vmem:[#allocation2 + $0x168] sm:$0xf]
        %v1324 = vld [vmem:[#allocation2 + $0x16c] sm:$0xf]
        %v1325 = vld [vmem:[#allocation2 + $0x170] sm:$0xf]
        %v1326 = vld [vmem:[#allocation2 + $0x174] sm:$0xf]
        %v1327 = vld [vmem:[#allocation2 + $0x178] sm:$0xf]
        %v1328 = vld [vmem:[#allocation2 + $0x17c] sm:$0xf]
        %v1330 = vunpack.c.l.b16 %v1312
        %v1331 = vpack.c.b16 %v885, %v1330
        %vm1332 = vcmask 1045504
        %v1333 = vrot.slane %v1331, 2
        %v1334 = vrot.slane %v898, 2
        %v1335 = vsel %vm1332, %v1333, %v1334
        %v1336 = vrot.slane %v899, 2
        %v1337 = vsel %vm1332, %v1334, %v1336
        %v1338 = vrot.slane %v900, 2
        %v1339 = vsel %vm1332, %v1336, %v1338
        %v1340 = vrot.slane %v901, 2
        %v1341 = vsel %vm1332, %v1338, %v1340
        %v1342 = vrot.slane %v902, 2
        %v1343 = vsel %vm1332, %v1340, %v1342
        %v1344 = vrot.slane %v1092, 2
        %v1345 = vsel %vm1332, %v1342, %v1344
        %v1369 = vunpack.c.l.b16 %v1313
        %v1370 = vunpack.c.l.b16 %v1314
        %v1371 = vunpack.c.l.b16 %v1315
        %v1372 = vunpack.c.l.b16 %v1316
        %v1373 = vunpack.c.l.b16 %v1317
        %v1374 = vunpack.c.l.b16 %v1318
        %v1375 = vunpack.c.l.b16 %v1319
        %v1376 = vunpack.c.l.b16 %v1320
        %v1377 = vunpack.c.l.b16 %v1321
        %v1378 = vunpack.c.l.b16 %v1322
        %v1379 = vunpack.c.l.b16 %v1323
        %v1380 = vunpack.c.l.b16 %v1324
        %v1381 = vunpack.c.l.b16 %v1325
        %v1382 = vunpack.c.l.b16 %v1326
        %v1383 = vunpack.c.l.b16 %v1327
        %v1384 = vunpack.c.l.b16 %v1328
        %v1385 = vpack.c.b16 %v1370, %v1369
        %v1386 = vpack.c.b16 %v1372, %v1371
        %v1387 = vpack.c.b16 %v1374, %v1373
        %v1388 = vpack.c.b16 %v1376, %v1375
        %v1389 = vpack.c.b16 %v1378, %v1377
        %v1390 = vpack.c.b16 %v1380, %v1379
        %v1391 = vpack.c.b16 %v1382, %v1381
        %v1392 = vpack.c.b16 %v1384, %v1383
        %1401 = vmatprep.subr.bf16.mxu0 0
        %1402 = vmatpush1.bf16.msra.mxu0 %v1392
        %1403 = vmatprep.subr.bf16.mxu0 0
        %1404 = vmatpush1.bf16.msra.mxu0 %v1391
        %1405 = vmatprep.subr.bf16.mxu0 0
        %1406 = vmatpush1.bf16.msra.mxu0 %v1390
        %1407 = vmatprep.subr.bf16.mxu0 0
        %1408 = vmatpush1.bf16.msra.mxu0 %v1389
        %1409 = vmatprep.subr.bf16.mxu0 0
        %1410 = vmatpush1.bf16.msra.mxu0 %v1388
        %1411 = vmatprep.subr.bf16.mxu0 0
        %1412 = vmatpush1.bf16.msra.mxu0 %v1387
        %1413 = vmatprep.subr.bf16.mxu0 0
        %1414 = vmatpush1.bf16.msra.mxu0 %v1386
        %1415 = vmatprep.subr.bf16.mxu0 0
        %1416 = vmatpush1.bf16.msra.mxu0 %v1385
        %1417 = vmatprep.subr.bf16.mxu0 0
        %1418 = vmatpush2.bf16.msra.mxu0 0
        %1419 = vmatprep.subr.bf16.mxu0 0
        %1420 = vmatpush2.bf16.msra.mxu0 0
        %1421 = vmatprep.subr.bf16.mxu0 0
        %1422 = vmatpush2.bf16.msra.mxu0 0
        %1423 = vmatprep.subr.bf16.mxu0 0
        %1424 = vmatpush2.bf16.msra.mxu0 0
        %1425 = vmatprep.subr.bf16.mxu0 0
        %1426 = vmatpush2.bf16.msra.mxu0 0
        %1427 = vmatprep.subr.bf16.mxu0 0
        %1428 = vmatpush2.bf16.msra.mxu0 0
        %1429 = vmatprep.subr.bf16.mxu0 0
        %1430 = vmatpush2.bf16.msra.mxu0 0
        %1431 = vmatprep.subr.bf16.mxu0 0
        %1432 = vmatpush2.bf16.msra.mxu0 0
        %1433 = vmatprep.mubr.bf16.mxu0 0
        %1434 = vmatmul.mubr.bf16.gmra.mxu0 %v1335
        %v1435 = vpop.f32.mrf.mxu0
        %v1436 = vadd.f32 0.0, %v1435
        %v1437 = vpop.f32.mrf.mxu0
        %v1438 = vpop.f32.mrf.mxu0
        %v1439 = vadd.f32 0.0, %v1438
        %v1440 = vpop.f32.mrf.mxu0
        %1441 = vmatprep.mubr.bf16.mxu0 0
        %1442 = vmatmul.mubr.bf16.gmra.mxu0 %v1337
        %v1443 = vpop.f32.mrf.mxu0
        %v1444 = vadd.f32 0.0, %v1443
        %v1445 = vpop.f32.mrf.mxu0
        %v1446 = vpop.f32.mrf.mxu0
        %v1447 = vadd.f32 0.0, %v1446
        %v1448 = vpop.f32.mrf.mxu0
        %1449 = vmatprep.mubr.bf16.mxu0 0
        %1450 = vmatmul.mubr.bf16.gmra.mxu0 %v1339
        %v1451 = vpop.f32.mrf.mxu0
        %v1452 = vadd.f32 0.0, %v1451
        %v1453 = vpop.f32.mrf.mxu0
        %v1454 = vpop.f32.mrf.mxu0
        %v1455 = vadd.f32 0.0, %v1454
        %v1456 = vpop.f32.mrf.mxu0
        %1457 = vmatprep.mubr.bf16.mxu0 0
        %1458 = vmatmul.mubr.bf16.gmra.mxu0 %v1341
        %v1459 = vpop.f32.mrf.mxu0
        %v1460 = vadd.f32 0.0, %v1459
        %v1461 = vpop.f32.mrf.mxu0
        %v1462 = vpop.f32.mrf.mxu0
        %v1463 = vadd.f32 0.0, %v1462
        %v1464 = vpop.f32.mrf.mxu0
        %1465 = vmatprep.mubr.bf16.mxu0 0
        %1466 = vmatmul.mubr.bf16.gmra.mxu0 %v1343
        %v1467 = vpop.f32.mrf.mxu0
        %v1468 = vadd.f32 0.0, %v1467
        %v1469 = vpop.f32.mrf.mxu0
        %v1470 = vpop.f32.mrf.mxu0
        %v1471 = vadd.f32 0.0, %v1470
        %v1472 = vpop.f32.mrf.mxu0
        %1473 = vmatprep.mubr.bf16.mxu0 0
        %1474 = vmatmul.mubr.bf16.gmra.mxu0 %v1345
        %v1475 = vpop.f32.mrf.mxu0
        %v1476 = vadd.f32 0.0, %v1475
        %v1477 = vpop.f32.mrf.mxu0
        %v1478 = vpop.f32.mrf.mxu0
        %v1479 = vadd.f32 0.0, %v1478
        %v1480 = vpop.f32.mrf.mxu0
        %1481 = vmatprep.mubr.bf16.mxu0 0
        %1482 = vmatmul.mubr.bf16.gmra.mxu0 %v1344
        %v1483 = vpop.f32.mrf.mxu0
        %v1484 = vadd.f32 0.0, %v1483
        %v1485 = vpop.f32.mrf.mxu0
        %v1486 = vpop.f32.mrf.mxu0
        %v1487 = vpop.f32.mrf.mxu0
        %1488 = vdwg.mxu0
        %v1489 = vadd.f32 %v1299, %v1436
        %v1490 = vadd.f32 %v1300, %v1439
        %v1491 = vadd.f32 %v1301, %v1444
        %v1492 = vadd.f32 %v1302, %v1447
        %v1493 = vadd.f32 %v1303, %v1452
        %v1494 = vadd.f32 %v1304, %v1455
        %v1495 = vadd.f32 %v1305, %v1460
        %v1496 = vadd.f32 %v1306, %v1463
        %v1497 = vadd.f32 %v1307, %v1468
        %v1498 = vadd.f32 %v1308, %v1471
        %v1499 = vadd.f32 %v1309, %v1476
        %v1500 = vadd.f32 %v1310, %v1479
        %v1501 = vadd.f32 %v1311, %v1484
        %v1502 = vld [vmem:[%s215 + $0x8] sm:$0xc]
        %v1503 = vld [vmem:[%s215 + $0xc] sm:$0xf]
        %v1504 = vld [vmem:[%s215 + $0x10] sm:$0xf]
        %v1505 = vld [vmem:[%s215 + $0x14] sm:$0xf]
        %v1506 = vld [vmem:[%s215 + $0x18] sm:$0xf]
        %v1507 = vld [vmem:[%s215 + $0x1c] sm:$0xf]
        %v1508 = vld [vmem:[%s215 + $0x20] sm:$0xf]
        %v1509 = vld [vmem:[%s215 + $0x24] sm:$0xf]
        %v1510 = vld [vmem:[%s215 + $0x28] sm:$0xf]
        %v1511 = vld [vmem:[%s215 + $0x2c] sm:$0xf]
        %v1512 = vld [vmem:[%s215 + $0x30] sm:$0xf]
        %v1513 = vld [vmem:[%s215 + $0x34] sm:$0xf]
        %v1514 = vld [vmem:[%s215 + $0x38] sm:$0xf]
        %v1515 = vld [vmem:[#allocation2 + $0x180] sm:$0xf]
        %v1516 = vld [vmem:[#allocation2 + $0x184] sm:$0xf]
        %v1517 = vld [vmem:[#allocation2 + $0x188] sm:$0xf]
        %v1518 = vld [vmem:[#allocation2 + $0x18c] sm:$0xf]
        %v1519 = vld [vmem:[#allocation2 + $0x190] sm:$0xf]
        %v1520 = vld [vmem:[#allocation2 + $0x194] sm:$0xf]
        %v1521 = vld [vmem:[#allocation2 + $0x198] sm:$0xf]
        %v1522 = vld [vmem:[#allocation2 + $0x19c] sm:$0xf]
        %v1523 = vld [vmem:[#allocation2 + $0x1a0] sm:$0xf]
        %v1524 = vld [vmem:[#allocation2 + $0x1a4] sm:$0xf]
        %v1525 = vld [vmem:[#allocation2 + $0x1a8] sm:$0xf]
        %v1526 = vld [vmem:[#allocation2 + $0x1ac] sm:$0xf]
        %v1527 = vld [vmem:[#allocation2 + $0x1b0] sm:$0xf]
        %v1528 = vld [vmem:[#allocation2 + $0x1b4] sm:$0xf]
        %v1529 = vld [vmem:[#allocation2 + $0x1b8] sm:$0xf]
        %v1530 = vld [vmem:[#allocation2 + $0x1bc] sm:$0xf]
        %v1544 = vunpack.c.l.b16 %v1502
        %v1545 = vunpack.c.l.b16 %v1503
        %v1546 = vunpack.c.l.b16 %v1504
        %v1547 = vunpack.c.l.b16 %v1505
        %v1548 = vunpack.c.l.b16 %v1506
        %v1549 = vunpack.c.l.b16 %v1507
        %v1550 = vunpack.c.l.b16 %v1508
        %v1551 = vunpack.c.l.b16 %v1509
        %v1552 = vunpack.c.l.b16 %v1510
        %v1553 = vunpack.c.l.b16 %v1511
        %v1554 = vunpack.c.l.b16 %v1512
        %v1555 = vunpack.c.l.b16 %v1513
        %v1556 = vunpack.c.l.b16 %v1514
        %v1557 = vpack.c.b16 %v1545, %v1544
        %v1558 = vpack.c.b16 %v1547, %v1546
        %v1559 = vpack.c.b16 %v1549, %v1548
        %v1560 = vpack.c.b16 %v1551, %v1550
        %v1561 = vpack.c.b16 %v1553, %v1552
        %v1562 = vpack.c.b16 %v1555, %v1554
        %v1563 = vpack.c.b16 %v1556, %v1556
        %v1564 = vrot.slane %v1557, 2
        %v1565 = vrot.slane %v1558, 2
        %v1566 = vsel %vm1332, %v1564, %v1565
        %v1567 = vrot.slane %v1559, 2
        %v1568 = vsel %vm1332, %v1565, %v1567
        %v1569 = vrot.slane %v1560, 2
        %v1570 = vsel %vm1332, %v1567, %v1569
        %v1571 = vrot.slane %v1561, 2
        %v1572 = vsel %vm1332, %v1569, %v1571
        %v1573 = vrot.slane %v1562, 2
        %v1574 = vsel %vm1332, %v1571, %v1573
        %v1575 = vrot.slane %v1563, 2
        %v1576 = vsel %vm1332, %v1573, %v1575
        %v1600 = vunpack.c.l.b16 %v1515
        %v1601 = vunpack.c.l.b16 %v1516
        %v1602 = vunpack.c.l.b16 %v1517
        %v1603 = vunpack.c.l.b16 %v1518
        %v1604 = vunpack.c.l.b16 %v1519
        %v1605 = vunpack.c.l.b16 %v1520
        %v1606 = vunpack.c.l.b16 %v1521
        %v1607 = vunpack.c.l.b16 %v1522
        %v1608 = vunpack.c.l.b16 %v1523
        %v1609 = vunpack.c.l.b16 %v1524
        %v1610 = vunpack.c.l.b16 %v1525
        %v1611 = vunpack.c.l.b16 %v1526
        %v1612 = vunpack.c.l.b16 %v1527
        %v1613 = vunpack.c.l.b16 %v1528
        %v1614 = vunpack.c.l.b16 %v1529
        %v1615 = vunpack.c.l.b16 %v1530
        %v1616 = vpack.c.b16 %v1601, %v1600
        %v1617 = vpack.c.b16 %v1603, %v1602
        %v1618 = vpack.c.b16 %v1605, %v1604
        %v1619 = vpack.c.b16 %v1607, %v1606
        %v1620 = vpack.c.b16 %v1609, %v1608
        %v1621 = vpack.c.b16 %v1611, %v1610
        %v1622 = vpack.c.b16 %v1613, %v1612
        %v1623 = vpack.c.b16 %v1615, %v1614
        %1632 = vmatprep.subr.bf16.mxu0 0
        %1633 = vmatpush1.bf16.msra.mxu0 %v1623
        %1634 = vmatprep.subr.bf16.mxu0 0
        %1635 = vmatpush1.bf16.msra.mxu0 %v1622
        %1636 = vmatprep.subr.bf16.mxu0 0
        %1637 = vmatpush1.bf16.msra.mxu0 %v1621
        %1638 = vmatprep.subr.bf16.mxu0 0
        %1639 = vmatpush1.bf16.msra.mxu0 %v1620
        %1640 = vmatprep.subr.bf16.mxu0 0
        %1641 = vmatpush1.bf16.msra.mxu0 %v1619
        %1642 = vmatprep.subr.bf16.mxu0 0
        %1643 = vmatpush1.bf16.msra.mxu0 %v1618
        %1644 = vmatprep.subr.bf16.mxu0 0
        %1645 = vmatpush1.bf16.msra.mxu0 %v1617
        %1646 = vmatprep.subr.bf16.mxu0 0
        %1647 = vmatpush1.bf16.msra.mxu0 %v1616
        %1648 = vmatprep.subr.bf16.mxu0 0
        %1649 = vmatpush2.bf16.msra.mxu0 0
        %1650 = vmatprep.subr.bf16.mxu0 0
        %1651 = vmatpush2.bf16.msra.mxu0 0
        %1652 = vmatprep.subr.bf16.mxu0 0
        %1653 = vmatpush2.bf16.msra.mxu0 0
        %1654 = vmatprep.subr.bf16.mxu0 0
        %1655 = vmatpush2.bf16.msra.mxu0 0
        %1656 = vmatprep.subr.bf16.mxu0 0
        %1657 = vmatpush2.bf16.msra.mxu0 0
        %1658 = vmatprep.subr.bf16.mxu0 0
        %1659 = vmatpush2.bf16.msra.mxu0 0
        %1660 = vmatprep.subr.bf16.mxu0 0
        %1661 = vmatpush2.bf16.msra.mxu0 0
        %1662 = vmatprep.subr.bf16.mxu0 0
        %1663 = vmatpush2.bf16.msra.mxu0 0
        %1664 = vmatprep.mubr.bf16.mxu0 0
        %1665 = vmatmul.mubr.bf16.gmra.mxu0 %v1566
        %v1666 = vpop.f32.mrf.mxu0
        %v1667 = vadd.f32 0.0, %v1666
        %v1668 = vpop.f32.mrf.mxu0
        %v1669 = vpop.f32.mrf.mxu0
        %v1670 = vadd.f32 0.0, %v1669
        %v1671 = vpop.f32.mrf.mxu0
        %1672 = vmatprep.mubr.bf16.mxu0 0
        %1673 = vmatmul.mubr.bf16.gmra.mxu0 %v1568
        %v1674 = vpop.f32.mrf.mxu0
        %v1675 = vadd.f32 0.0, %v1674
        %v1676 = vpop.f32.mrf.mxu0
        %v1677 = vpop.f32.mrf.mxu0
        %v1678 = vadd.f32 0.0, %v1677
        %v1679 = vpop.f32.mrf.mxu0
        %1680 = vmatprep.mubr.bf16.mxu0 0
        %1681 = vmatmul.mubr.bf16.gmra.mxu0 %v1570
        %v1682 = vpop.f32.mrf.mxu0
        %v1683 = vadd.f32 0.0, %v1682
        %v1684 = vpop.f32.mrf.mxu0
        %v1685 = vpop.f32.mrf.mxu0
        %v1686 = vadd.f32 0.0, %v1685
        %v1687 = vpop.f32.mrf.mxu0
        %1688 = vmatprep.mubr.bf16.mxu0 0
        %1689 = vmatmul.mubr.bf16.gmra.mxu0 %v1572
        %v1690 = vpop.f32.mrf.mxu0
        %v1691 = vadd.f32 0.0, %v1690
        %v1692 = vpop.f32.mrf.mxu0
        %v1693 = vpop.f32.mrf.mxu0
        %v1694 = vadd.f32 0.0, %v1693
        %v1695 = vpop.f32.mrf.mxu0
        %1696 = vmatprep.mubr.bf16.mxu0 0
        %1697 = vmatmul.mubr.bf16.gmra.mxu0 %v1574
        %v1698 = vpop.f32.mrf.mxu0
        %v1699 = vadd.f32 0.0, %v1698
        %v1700 = vpop.f32.mrf.mxu0
        %v1701 = vpop.f32.mrf.mxu0
        %v1702 = vadd.f32 0.0, %v1701
        %v1703 = vpop.f32.mrf.mxu0
        %1704 = vmatprep.mubr.bf16.mxu0 0
        %1705 = vmatmul.mubr.bf16.gmra.mxu0 %v1576
        %v1706 = vpop.f32.mrf.mxu0
        %v1707 = vadd.f32 0.0, %v1706
        %v1708 = vpop.f32.mrf.mxu0
        %v1709 = vpop.f32.mrf.mxu0
        %v1710 = vadd.f32 0.0, %v1709
        %v1711 = vpop.f32.mrf.mxu0
        %1712 = vmatprep.mubr.bf16.mxu0 0
        %1713 = vmatmul.mubr.bf16.gmra.mxu0 %v1575
        %v1714 = vpop.f32.mrf.mxu0
        %v1715 = vadd.f32 0.0, %v1714
        %v1716 = vpop.f32.mrf.mxu0
        %v1717 = vpop.f32.mrf.mxu0
        %v1718 = vpop.f32.mrf.mxu0
        %1719 = vdwg.mxu0
        %v1720 = vadd.f32 %v1489, %v1667
        %v1721 = vadd.f32 %v1490, %v1670
        %v1722 = vadd.f32 %v1491, %v1675
        %v1723 = vadd.f32 %v1492, %v1678
        %v1724 = vadd.f32 %v1493, %v1683
        %v1725 = vadd.f32 %v1494, %v1686
        %v1726 = vadd.f32 %v1495, %v1691
        %v1727 = vadd.f32 %v1496, %v1694
        %v1728 = vadd.f32 %v1497, %v1699
        %v1729 = vadd.f32 %v1498, %v1702
        %v1730 = vadd.f32 %v1499, %v1707
        %v1731 = vadd.f32 %v1500, %v1710
        %v1732 = vadd.f32 %v1501, %v1715
        %v1733 = vld [vmem:[%s215 + $0x8] sm:$0xc]
        %v1734 = vld [vmem:[%s215 + $0xc] sm:$0xf]
        %v1735 = vld [vmem:[%s215 + $0x10] sm:$0xf]
        %v1736 = vld [vmem:[%s215 + $0x14] sm:$0xf]
        %v1737 = vld [vmem:[%s215 + $0x18] sm:$0xf]
        %v1738 = vld [vmem:[%s215 + $0x1c] sm:$0xf]
        %v1739 = vld [vmem:[%s215 + $0x20] sm:$0xf]
        %v1740 = vld [vmem:[%s215 + $0x24] sm:$0xf]
        %v1741 = vld [vmem:[%s215 + $0x28] sm:$0xf]
        %v1742 = vld [vmem:[%s215 + $0x2c] sm:$0xf]
        %v1743 = vld [vmem:[%s215 + $0x30] sm:$0xf]
        %v1744 = vld [vmem:[%s215 + $0x34] sm:$0xf]
        %v1745 = vld [vmem:[%s215 + $0x38] sm:$0xf]
        %v1746 = vld [vmem:[%s215 + $0x3c] sm:$0x1]
        %v1747 = vld [vmem:[#allocation2 + $0x1c0] sm:$0xf]
        %v1748 = vld [vmem:[#allocation2 + $0x1c4] sm:$0xf]
        %v1749 = vld [vmem:[#allocation2 + $0x1c8] sm:$0xf]
        %v1750 = vld [vmem:[#allocation2 + $0x1cc] sm:$0xf]
        %v1751 = vld [vmem:[#allocation2 + $0x1d0] sm:$0xf]
        %v1752 = vld [vmem:[#allocation2 + $0x1d4] sm:$0xf]
        %v1753 = vld [vmem:[#allocation2 + $0x1d8] sm:$0xf]
        %v1754 = vld [vmem:[#allocation2 + $0x1dc] sm:$0xf]
        %v1755 = vld [vmem:[#allocation2 + $0x1e0] sm:$0xf]
        %v1756 = vld [vmem:[#allocation2 + $0x1e4] sm:$0xf]
        %v1757 = vld [vmem:[#allocation2 + $0x1e8] sm:$0xf]
        %v1758 = vld [vmem:[#allocation2 + $0x1ec] sm:$0xf]
        %v1759 = vld [vmem:[#allocation2 + $0x1f0] sm:$0xf]
        %v1760 = vld [vmem:[#allocation2 + $0x1f4] sm:$0xf]
        %v1761 = vld [vmem:[#allocation2 + $0x1f8] sm:$0xf]
        %v1762 = vld [vmem:[#allocation2 + $0x1fc] sm:$0xf]
        %v1777 = vunpack.c.l.b16 %v1733
        %v1778 = vunpack.c.l.b16 %v1734
        %v1779 = vunpack.c.l.b16 %v1735
        %v1780 = vunpack.c.l.b16 %v1736
        %v1781 = vunpack.c.l.b16 %v1737
        %v1782 = vunpack.c.l.b16 %v1738
        %v1783 = vunpack.c.l.b16 %v1739
        %v1784 = vunpack.c.l.b16 %v1740
        %v1785 = vunpack.c.l.b16 %v1741
        %v1786 = vunpack.c.l.b16 %v1742
        %v1787 = vunpack.c.l.b16 %v1743
        %v1788 = vunpack.c.l.b16 %v1744
        %v1789 = vunpack.c.l.b16 %v1745
        %v1790 = vunpack.c.l.b16 %v1746
        %v1791 = vpack.c.b16 %v1778, %v1777
        %v1792 = vpack.c.b16 %v1780, %v1779
        %v1793 = vpack.c.b16 %v1782, %v1781
        %v1794 = vpack.c.b16 %v1784, %v1783
        %v1795 = vpack.c.b16 %v1786, %v1785
        %v1796 = vpack.c.b16 %v1788, %v1787
        %v1797 = vpack.c.b16 %v1790, %v1789
        %vm1798 = vsmask.f32 5376
        %v1800 = vshrl.u32 %v1791, 16
        %v1802 = vrot.slane %v1800, 2
        %v1803 = vshll.u32 %v1791, 16
        %v1805 = vrot.slane %v1803, 3
        %v1806 = vor.u32 %v1802, %v1805
        %v1808 = vshrl.u32 %v1792, 16
        %v1810 = vrot.slane %v1808, 2
        %v1811 = vshll.u32 %v1792, 16
        %v1813 = vrot.slane %v1811, 3
        %v1814 = vor.u32 %v1810, %v1813
        %v1815 = vsel %vm1798, %v1806, %v1814
        %v1817 = vshrl.u32 %v1793, 16
        %v1819 = vrot.slane %v1817, 2
        %v1820 = vshll.u32 %v1793, 16
        %v1822 = vrot.slane %v1820, 3
        %v1823 = vor.u32 %v1819, %v1822
        %v1824 = vsel %vm1798, %v1814, %v1823
        %v1826 = vshrl.u32 %v1794, 16
        %v1828 = vrot.slane %v1826, 2
        %v1829 = vshll.u32 %v1794, 16
        %v1831 = vrot.slane %v1829, 3
        %v1832 = vor.u32 %v1828, %v1831
        %v1833 = vsel %vm1798, %v1823, %v1832
        %v1835 = vshrl.u32 %v1795, 16
        %v1837 = vrot.slane %v1835, 2
        %v1838 = vshll.u32 %v1795, 16
        %v1840 = vrot.slane %v1838, 3
        %v1841 = vor.u32 %v1837, %v1840
        %v1842 = vsel %vm1798, %v1832, %v1841
        %v1844 = vshrl.u32 %v1796, 16
        %v1846 = vrot.slane %v1844, 2
        %v1847 = vshll.u32 %v1796, 16
        %v1849 = vrot.slane %v1847, 3
        %v1850 = vor.u32 %v1846, %v1849
        %v1851 = vsel %vm1798, %v1841, %v1850
        %v1853 = vshrl.u32 %v1797, 16
        %v1855 = vrot.slane %v1853, 2
        %v1856 = vshll.u32 %v1797, 16
        %v1858 = vrot.slane %v1856, 3
        %v1859 = vor.u32 %v1855, %v1858
        %v1860 = vsel %vm1798, %v1850, %v1859
        %v1884 = vunpack.c.l.b16 %v1747
        %v1885 = vunpack.c.l.b16 %v1748
        %v1886 = vunpack.c.l.b16 %v1749
        %v1887 = vunpack.c.l.b16 %v1750
        %v1888 = vunpack.c.l.b16 %v1751
        %v1889 = vunpack.c.l.b16 %v1752
        %v1890 = vunpack.c.l.b16 %v1753
        %v1891 = vunpack.c.l.b16 %v1754
        %v1892 = vunpack.c.l.b16 %v1755
        %v1893 = vunpack.c.l.b16 %v1756
        %v1894 = vunpack.c.l.b16 %v1757
        %v1895 = vunpack.c.l.b16 %v1758
        %v1896 = vunpack.c.l.b16 %v1759
        %v1897 = vunpack.c.l.b16 %v1760
        %v1898 = vunpack.c.l.b16 %v1761
        %v1899 = vunpack.c.l.b16 %v1762
        %v1900 = vpack.c.b16 %v1885, %v1884
        %v1901 = vpack.c.b16 %v1887, %v1886
        %v1902 = vpack.c.b16 %v1889, %v1888
        %v1903 = vpack.c.b16 %v1891, %v1890
        %v1904 = vpack.c.b16 %v1893, %v1892
        %v1905 = vpack.c.b16 %v1895, %v1894
        %v1906 = vpack.c.b16 %v1897, %v1896
        %v1907 = vpack.c.b16 %v1899, %v1898
        %1916 = vmatprep.subr.bf16.mxu0 0
        %1917 = vmatpush1.bf16.msra.mxu0 %v1907
        %1918 = vmatprep.subr.bf16.mxu0 0
        %1919 = vmatpush1.bf16.msra.mxu0 %v1906
        %1920 = vmatprep.subr.bf16.mxu0 0
        %1921 = vmatpush1.bf16.msra.mxu0 %v1905
        %1922 = vmatprep.subr.bf16.mxu0 0
        %1923 = vmatpush1.bf16.msra.mxu0 %v1904
        %1924 = vmatprep.subr.bf16.mxu0 0
        %1925 = vmatpush1.bf16.msra.mxu0 %v1903
        %1926 = vmatprep.subr.bf16.mxu0 0
        %1927 = vmatpush1.bf16.msra.mxu0 %v1902
        %1928 = vmatprep.subr.bf16.mxu0 0
        %1929 = vmatpush1.bf16.msra.mxu0 %v1901
        %1930 = vmatprep.subr.bf16.mxu0 0
        %1931 = vmatpush1.bf16.msra.mxu0 %v1900
        %1932 = vmatprep.subr.bf16.mxu0 0
        %1933 = vmatpush2.bf16.msra.mxu0 0
        %1934 = vmatprep.subr.bf16.mxu0 0
        %1935 = vmatpush2.bf16.msra.mxu0 0
        %1936 = vmatprep.subr.bf16.mxu0 0
        %1937 = vmatpush2.bf16.msra.mxu0 0
        %1938 = vmatprep.subr.bf16.mxu0 0
        %1939 = vmatpush2.bf16.msra.mxu0 0
        %1940 = vmatprep.subr.bf16.mxu0 0
        %1941 = vmatpush2.bf16.msra.mxu0 0
        %1942 = vmatprep.subr.bf16.mxu0 0
        %1943 = vmatpush2.bf16.msra.mxu0 0
        %1944 = vmatprep.subr.bf16.mxu0 0
        %1945 = vmatpush2.bf16.msra.mxu0 0
        %1946 = vmatprep.subr.bf16.mxu0 0
        %1947 = vmatpush2.bf16.msra.mxu0 0
        %1948 = vmatprep.mubr.bf16.mxu0 0
        %1949 = vmatmul.mubr.bf16.gmra.mxu0 %v1815
        %v1950 = vpop.f32.mrf.mxu0
        %v1951 = vadd.f32 0.0, %v1950
        %v1952 = vpop.f32.mrf.mxu0
        %v1953 = vpop.f32.mrf.mxu0
        %v1954 = vadd.f32 0.0, %v1953
        %v1955 = vpop.f32.mrf.mxu0
        %1956 = vmatprep.mubr.bf16.mxu0 0
        %1957 = vmatmul.mubr.bf16.gmra.mxu0 %v1824
        %v1958 = vpop.f32.mrf.mxu0
        %v1959 = vadd.f32 0.0, %v1958
        %v1960 = vpop.f32.mrf.mxu0
        %v1961 = vpop.f32.mrf.mxu0
        %v1962 = vadd.f32 0.0, %v1961
        %v1963 = vpop.f32.mrf.mxu0
        %1964 = vmatprep.mubr.bf16.mxu0 0
        %1965 = vmatmul.mubr.bf16.gmra.mxu0 %v1833
        %v1966 = vpop.f32.mrf.mxu0
        %v1967 = vadd.f32 0.0, %v1966
        %v1968 = vpop.f32.mrf.mxu0
        %v1969 = vpop.f32.mrf.mxu0
        %v1970 = vadd.f32 0.0, %v1969
        %v1971 = vpop.f32.mrf.mxu0
        %1972 = vmatprep.mubr.bf16.mxu0 0
        %1973 = vmatmul.mubr.bf16.gmra.mxu0 %v1842
        %v1974 = vpop.f32.mrf.mxu0
        %v1975 = vadd.f32 0.0, %v1974
        %v1976 = vpop.f32.mrf.mxu0
        %v1977 = vpop.f32.mrf.mxu0
        %v1978 = vadd.f32 0.0, %v1977
        %v1979 = vpop.f32.mrf.mxu0
        %1980 = vmatprep.mubr.bf16.mxu0 0
        %1981 = vmatmul.mubr.bf16.gmra.mxu0 %v1851
        %v1982 = vpop.f32.mrf.mxu0
        %v1983 = vadd.f32 0.0, %v1982
        %v1984 = vpop.f32.mrf.mxu0
        %v1985 = vpop.f32.mrf.mxu0
        %v1986 = vadd.f32 0.0, %v1985
        %v1987 = vpop.f32.mrf.mxu0
        %1988 = vmatprep.mubr.bf16.mxu0 0
        %1989 = vmatmul.mubr.bf16.gmra.mxu0 %v1860
        %v1990 = vpop.f32.mrf.mxu0
        %v1991 = vadd.f32 0.0, %v1990
        %v1992 = vpop.f32.mrf.mxu0
        %v1993 = vpop.f32.mrf.mxu0
        %v1994 = vadd.f32 0.0, %v1993
        %v1995 = vpop.f32.mrf.mxu0
        %1996 = vmatprep.mubr.bf16.mxu0 0
        %1997 = vmatmul.mubr.bf16.gmra.mxu0 %v1859
        %v1998 = vpop.f32.mrf.mxu0
        %v1999 = vadd.f32 0.0, %v1998
        %v2000 = vpop.f32.mrf.mxu0
        %v2001 = vpop.f32.mrf.mxu0
        %v2002 = vpop.f32.mrf.mxu0
        %2003 = vdwg.mxu0
        %v2004 = vadd.f32 %v1720, %v1951
        %v2005 = vadd.f32 %v1721, %v1954
        %v2006 = vadd.f32 %v1722, %v1959
        %v2007 = vadd.f32 %v1723, %v1962
        %v2008 = vadd.f32 %v1724, %v1967
        %v2009 = vadd.f32 %v1725, %v1970
        %v2010 = vadd.f32 %v1726, %v1975
        %v2011 = vadd.f32 %v1727, %v1978
        %v2012 = vadd.f32 %v1728, %v1983
        %v2013 = vadd.f32 %v1729, %v1986
        %v2014 = vadd.f32 %v1730, %v1991
        %v2015 = vadd.f32 %v1731, %v1994
        %v2016 = vadd.f32 %v1732, %v1999
        %v2017 = vld [vmem:[%s215 + $0x8] sm:$0x8]
        %v2018 = vld [vmem:[#allocation2 + $0x200] sm:$0xf]
        %v2019 = vld [vmem:[#allocation2 + $0x204] sm:$0xf]
        %v2020 = vld [vmem:[#allocation2 + $0x208] sm:$0xf]
        %v2021 = vld [vmem:[#allocation2 + $0x20c] sm:$0xf]
        %v2022 = vld [vmem:[#allocation2 + $0x210] sm:$0xf]
        %v2023 = vld [vmem:[#allocation2 + $0x214] sm:$0xf]
        %v2024 = vld [vmem:[#allocation2 + $0x218] sm:$0xf]
        %v2025 = vld [vmem:[#allocation2 + $0x21c] sm:$0xf]
        %v2026 = vld [vmem:[#allocation2 + $0x220] sm:$0xf]
        %v2027 = vld [vmem:[#allocation2 + $0x224] sm:$0xf]
        %v2028 = vld [vmem:[#allocation2 + $0x228] sm:$0xf]
        %v2029 = vld [vmem:[#allocation2 + $0x22c] sm:$0xf]
        %v2030 = vld [vmem:[#allocation2 + $0x230] sm:$0xf]
        %v2031 = vld [vmem:[#allocation2 + $0x234] sm:$0xf]
        %v2032 = vld [vmem:[#allocation2 + $0x238] sm:$0xf]
        %v2033 = vld [vmem:[#allocation2 + $0x23c] sm:$0xf]
        %v2035 = vunpack.c.l.b16 %v2017
        %v2036 = vpack.c.b16 %v1778, %v2035
        %vm2037 = vcmask 1044480
        %v2038 = vrot.slane %v2036, 3
        %v2039 = vrot.slane %v1792, 3
        %v2040 = vsel %vm2037, %v2038, %v2039
        %v2041 = vrot.slane %v1793, 3
        %v2042 = vsel %vm2037, %v2039, %v2041
        %v2043 = vrot.slane %v1794, 3
        %v2044 = vsel %vm2037, %v2041, %v2043
        %v2045 = vrot.slane %v1795, 3
        %v2046 = vsel %vm2037, %v2043, %v2045
        %v2047 = vrot.slane %v1796, 3
        %v2048 = vsel %vm2037, %v2045, %v2047
        %v2049 = vrot.slane %v1797, 3
        %v2050 = vsel %vm2037, %v2047, %v2049
        %v2074 = vunpack.c.l.b16 %v2018
        %v2075 = vunpack.c.l.b16 %v2019
        %v2076 = vunpack.c.l.b16 %v2020
        %v2077 = vunpack.c.l.b16 %v2021
        %v2078 = vunpack.c.l.b16 %v2022
        %v2079 = vunpack.c.l.b16 %v2023
        %v2080 = vunpack.c.l.b16 %v2024
        %v2081 = vunpack.c.l.b16 %v2025
        %v2082 = vunpack.c.l.b16 %v2026
        %v2083 = vunpack.c.l.b16 %v2027
        %v2084 = vunpack.c.l.b16 %v2028
        %v2085 = vunpack.c.l.b16 %v2029
        %v2086 = vunpack.c.l.b16 %v2030
        %v2087 = vunpack.c.l.b16 %v2031
        %v2088 = vunpack.c.l.b16 %v2032
        %v2089 = vunpack.c.l.b16 %v2033
        %v2090 = vpack.c.b16 %v2075, %v2074
        %v2091 = vpack.c.b16 %v2077, %v2076
        %v2092 = vpack.c.b16 %v2079, %v2078
        %v2093 = vpack.c.b16 %v2081, %v2080
        %v2094 = vpack.c.b16 %v2083, %v2082
        %v2095 = vpack.c.b16 %v2085, %v2084
        %v2096 = vpack.c.b16 %v2087, %v2086
        %v2097 = vpack.c.b16 %v2089, %v2088
        %2106 = vmatprep.subr.bf16.mxu0 0
        %2107 = vmatpush1.bf16.msra.mxu0 %v2097
        %2108 = vmatprep.subr.bf16.mxu0 0
        %2109 = vmatpush1.bf16.msra.mxu0 %v2096
        %2110 = vmatprep.subr.bf16.mxu0 0
        %2111 = vmatpush1.bf16.msra.mxu0 %v2095
        %2112 = vmatprep.subr.bf16.mxu0 0
        %2113 = vmatpush1.bf16.msra.mxu0 %v2094
        %2114 = vmatprep.subr.bf16.mxu0 0
        %2115 = vmatpush1.bf16.msra.mxu0 %v2093
        %2116 = vmatprep.subr.bf16.mxu0 0
        %2117 = vmatpush1.bf16.msra.mxu0 %v2092
        %2118 = vmatprep.subr.bf16.mxu0 0
        %2119 = vmatpush1.bf16.msra.mxu0 %v2091
        %2120 = vmatprep.subr.bf16.mxu0 0
        %2121 = vmatpush1.bf16.msra.mxu0 %v2090
        %2122 = vmatprep.subr.bf16.mxu0 0
        %2123 = vmatpush2.bf16.msra.mxu0 0
        %2124 = vmatprep.subr.bf16.mxu0 0
        %2125 = vmatpush2.bf16.msra.mxu0 0
        %2126 = vmatprep.subr.bf16.mxu0 0
        %2127 = vmatpush2.bf16.msra.mxu0 0
        %2128 = vmatprep.subr.bf16.mxu0 0
        %2129 = vmatpush2.bf16.msra.mxu0 0
        %2130 = vmatprep.subr.bf16.mxu0 0
        %2131 = vmatpush2.bf16.msra.mxu0 0
        %2132 = vmatprep.subr.bf16.mxu0 0
        %2133 = vmatpush2.bf16.msra.mxu0 0
        %2134 = vmatprep.subr.bf16.mxu0 0
        %2135 = vmatpush2.bf16.msra.mxu0 0
        %2136 = vmatprep.subr.bf16.mxu0 0
        %2137 = vmatpush2.bf16.msra.mxu0 0
        %2138 = vmatprep.mubr.bf16.mxu0 0
        %2139 = vmatmul.mubr.bf16.gmra.mxu0 %v2040
        %v2140 = vpop.f32.mrf.mxu0
        %v2141 = vadd.f32 0.0, %v2140
        %v2142 = vpop.f32.mrf.mxu0
        %v2143 = vpop.f32.mrf.mxu0
        %v2144 = vadd.f32 0.0, %v2143
        %v2145 = vpop.f32.mrf.mxu0
        %2146 = vmatprep.mubr.bf16.mxu0 0
        %2147 = vmatmul.mubr.bf16.gmra.mxu0 %v2042
        %v2148 = vpop.f32.mrf.mxu0
        %v2149 = vadd.f32 0.0, %v2148
        %v2150 = vpop.f32.mrf.mxu0
        %v2151 = vpop.f32.mrf.mxu0
        %v2152 = vadd.f32 0.0, %v2151
        %v2153 = vpop.f32.mrf.mxu0
        %2154 = vmatprep.mubr.bf16.mxu0 0
        %2155 = vmatmul.mubr.bf16.gmra.mxu0 %v2044
        %v2156 = vpop.f32.mrf.mxu0
        %v2157 = vadd.f32 0.0, %v2156
        %v2158 = vpop.f32.mrf.mxu0
        %v2159 = vpop.f32.mrf.mxu0
        %v2160 = vadd.f32 0.0, %v2159
        %v2161 = vpop.f32.mrf.mxu0
        %2162 = vmatprep.mubr.bf16.mxu0 0
        %2163 = vmatmul.mubr.bf16.gmra.mxu0 %v2046
        %v2164 = vpop.f32.mrf.mxu0
        %v2165 = vadd.f32 0.0, %v2164
        %v2166 = vpop.f32.mrf.mxu0
        %v2167 = vpop.f32.mrf.mxu0
        %v2168 = vadd.f32 0.0, %v2167
        %v2169 = vpop.f32.mrf.mxu0
        %2170 = vmatprep.mubr.bf16.mxu0 0
        %2171 = vmatmul.mubr.bf16.gmra.mxu0 %v2048
        %v2172 = vpop.f32.mrf.mxu0
        %v2173 = vadd.f32 0.0, %v2172
        %v2174 = vpop.f32.mrf.mxu0
        %v2175 = vpop.f32.mrf.mxu0
        %v2176 = vadd.f32 0.0, %v2175
        %v2177 = vpop.f32.mrf.mxu0
        %2178 = vmatprep.mubr.bf16.mxu0 0
        %2179 = vmatmul.mubr.bf16.gmra.mxu0 %v2050
        %v2180 = vpop.f32.mrf.mxu0
        %v2181 = vadd.f32 0.0, %v2180
        %v2182 = vpop.f32.mrf.mxu0
        %v2183 = vpop.f32.mrf.mxu0
        %v2184 = vadd.f32 0.0, %v2183
        %v2185 = vpop.f32.mrf.mxu0
        %2186 = vmatprep.mubr.bf16.mxu0 0
        %2187 = vmatmul.mubr.bf16.gmra.mxu0 %v2049
        %v2188 = vpop.f32.mrf.mxu0
        %v2189 = vadd.f32 0.0, %v2188
        %v2190 = vpop.f32.mrf.mxu0
        %v2191 = vpop.f32.mrf.mxu0
        %v2192 = vpop.f32.mrf.mxu0
        %2193 = vdwg.mxu0
        %v2194 = vadd.f32 %v2004, %v2141
        %v2195 = vadd.f32 %v2005, %v2144
        %v2196 = vadd.f32 %v2006, %v2149
        %v2197 = vadd.f32 %v2007, %v2152
        %v2198 = vadd.f32 %v2008, %v2157
        %v2199 = vadd.f32 %v2009, %v2160
        %v2200 = vadd.f32 %v2010, %v2165
        %v2201 = vadd.f32 %v2011, %v2168
        %v2202 = vadd.f32 %v2012, %v2173
        %v2203 = vadd.f32 %v2013, %v2176
        %v2204 = vadd.f32 %v2014, %v2181
        %v2205 = vadd.f32 %v2015, %v2184
        %v2206 = vadd.f32 %v2016, %v2189
        %v2207 = vld [vmem:[%s218] sm:$0x1]
        %v2209 = vlaneseq
        %v2210 = vshrl.u32 %v2209, 7
        %v2211 = vsub.s32 0, %v2210
        %v2212 = vrot.slane %v2207, %v2211
        %v2214 = vadd.f32 %v2194, %v2212
        %v2215 = vadd.f32 %v2195, %v2212
        %v2216 = vadd.f32 %v2196, %v2212
        %v2217 = vadd.f32 %v2197, %v2212
        %v2218 = vadd.f32 %v2198, %v2212
        %v2219 = vadd.f32 %v2199, %v2212
        %v2220 = vadd.f32 %v2200, %v2212
        %v2221 = vadd.f32 %v2201, %v2212
        %v2222 = vadd.f32 %v2202, %v2212
        %v2223 = vadd.f32 %v2203, %v2212
        %v2224 = vadd.f32 %v2204, %v2212
        %v2225 = vadd.f32 %v2205, %v2212
        %v2226 = vadd.f32 %v2206, %v2212
        %v2227 = vmax.f32 %v2214, 0.0
        %v2228 = vmax.f32 %v2215, 0.0
        %v2229 = vmax.f32 %v2216, 0.0
        %v2230 = vmax.f32 %v2217, 0.0
        %v2231 = vmax.f32 %v2218, 0.0
        %v2232 = vmax.f32 %v2219, 0.0
        %v2233 = vmax.f32 %v2220, 0.0
        %v2234 = vmax.f32 %v2221, 0.0
        %v2235 = vmax.f32 %v2222, 0.0
        %v2236 = vmax.f32 %v2223, 0.0
        %v2237 = vmax.f32 %v2224, 0.0
        %v2238 = vmax.f32 %v2225, 0.0
        %v2239 = vmax.f32 %v2226, 0.0
        %v2240 = vpack.c.bf16 %v2228, %v2227
        %v2241 = vpack.c.bf16 %v2230, %v2229
        %v2242 = vpack.c.bf16 %v2232, %v2231
        %v2243 = vpack.c.bf16 %v2234, %v2233
        %v2244 = vpack.c.bf16 %v2236, %v2235
        %v2245 = vpack.c.bf16 %v2238, %v2237
        %v2246 = vpack.c.bf16 %v2239, %v2239
        %v2254 = vunpack.c.l.b16 %v2240
        %v2255 = vunpack.c.h.b16 %v2240
        %v2256 = vunpack.c.l.b16 %v2241
        %v2257 = vunpack.c.h.b16 %v2241
        %v2258 = vunpack.c.l.b16 %v2242
        %v2259 = vunpack.c.h.b16 %v2242
        %v2260 = vunpack.c.l.b16 %v2243
        %v2261 = vunpack.c.h.b16 %v2243
        %v2262 = vunpack.c.l.b16 %v2244
        %v2263 = vunpack.c.h.b16 %v2244
        %v2264 = vunpack.c.l.b16 %v2245
        %v2265 = vunpack.c.h.b16 %v2245
        %v2266 = vunpack.c.l.b16 %v2246
        %v2267 = vpack.c.b16 %v2254, %v2254
        %v2268 = vpack.c.b16 %v2255, %v2255
        %v2269 = vpack.c.b16 %v2256, %v2256
        %v2270 = vpack.c.b16 %v2257, %v2257
        %v2271 = vpack.c.b16 %v2258, %v2258
        %v2272 = vpack.c.b16 %v2259, %v2259
        %v2273 = vpack.c.b16 %v2260, %v2260
        %v2274 = vpack.c.b16 %v2261, %v2261
        %v2275 = vpack.c.b16 %v2262, %v2262
        %v2276 = vpack.c.b16 %v2263, %v2263
        %v2277 = vpack.c.b16 %v2264, %v2264
        %v2278 = vpack.c.b16 %v2265, %v2265
        %v2279 = vpack.c.b16 %v2266, %v2266
        %2293 = vst [vmem:[%s226] sm:$0xf] %v2267
        %2294 = vst [vmem:[%s226 + $0x4] sm:$0xf] %v2268
        %2295 = vst [vmem:[%s226 + $0x8] sm:$0xf] %v2269
        %2296 = vst [vmem:[%s226 + $0xc] sm:$0xf] %v2270
        %2297 = vst [vmem:[%s226 + $0x10] sm:$0xf] %v2271
        %2298 = vst [vmem:[%s226 + $0x14] sm:$0xf] %v2272
        %2299 = vst [vmem:[%s226 + $0x18] sm:$0xf] %v2273
        %2300 = vst [vmem:[%s226 + $0x1c] sm:$0xf] %v2274
        %2301 = vst [vmem:[%s226 + $0x20] sm:$0xf] %v2275
        %2302 = vst [vmem:[%s226 + $0x24] sm:$0xf] %v2276
        %2303 = vst [vmem:[%s226 + $0x28] sm:$0xf] %v2277
        %2304 = vst [vmem:[%s226 + $0x2c] sm:$0xf] %v2278
        %2305 = vst [vmem:[%s226 + $0x30] sm:$0x3] %v2279
        %p2306 = scmp.lt.s32.totalorder %s20, 1
        %s2307 = scalar_select %p2306, %s20, 1
        %p2308 = scmp.lt.s32.totalorder %s19, 0
        %s2309 = scalar_select %p2308, %s19, 0
        %s2310 = smul.addr %s2307, 13
        %s2311 = sadd.s32 %s2309, %s2310
        %s2312 = smul.addr %s2311, 4
        %s2313 = scalar_lea.vmem %s3, %s2312
        // Predicated region
        $region37: #{tpu_custom_call.1} parent=31 // pred_check
          %p2314 = pneg %p125
        $region38: #{tpu_custom_call.1} parent=31 // pred_check_branch
          %2316 = sbr.rel (%p2314) target = $region40
        $region39: #{tpu_custom_call.1} parent=31 // pred_region
          _
        $region40: #{tpu_custom_call.1} parent=31 // pred_fallthru
          _
      $region32: #{tpu_custom_call.1} parent=5 // pred_fallthru
        _
      %p2317 = scmp.le.s32.totalorder 2, %s10
      // Predicated region
      $region41: #{tpu_custom_call.1} parent=5 // pred_check
        %p2318 = pneg %p2317
      $region42: #{tpu_custom_call.1} parent=5 // pred_check_branch
        %2320 = sbr.rel (%p2318) target = $region44
      $region43: #{tpu_custom_call.1} parent=5 // pred_region
        %s2321 = ssub.s32 %s10, 2
        // Predicated region
        $region45: #{tpu_custom_call.1} parent=43 // pred_check
          %p2322 = pneg %p131
        $region46: #{tpu_custom_call.1} parent=43 // pred_check_branch
          %2324 = sbr.rel (%p2322) target = $region48
        $region47: #{tpu_custom_call.1} parent=43 // pred_region
          %p2325 = scmp.lt.s32.totalorder %s22, 1
          %s2326 = scalar_select %p2325, %s22, 1
          %p2327 = scmp.lt.s32.totalorder %s21, 0
          %s2328 = scalar_select %p2327, %s21, 0
          %s2329 = smul.addr %s2326, 13
          %s2330 = sadd.s32 %s2328, %s2329
          %s2331 = smul.addr %s2330, 4
          %s2332 = scalar_lea.vmem %s3, %s2331
        $region48: #{tpu_custom_call.1} parent=43 // pred_fallthru
          _
      $region44: #{tpu_custom_call.1} parent=5 // pred_fallthru
        _
    $region6: #{tpu_custom_call.1} parent=1 // loop_footer
      %s14 = sadd.s32 1, %s10
    $region7: #{tpu_custom_call.1} parent=1 // loop_footer_branch
      %9 = sbr.rel target = $region3
    $region8: #{tpu_custom_call.1} parent=1 // loop_exit
      _
    %2333 = vsyncpa [#allocation3], 1
    %s2334 = scalar_lea.sflag [#allocation3], 1
    %2335 = vsyncpa %s2334, 1

</llo_original>
